<compile_context>
chip_gen: v6e
topology: v6e:2x2x1
jax: 0.10.0
libtpu: 0.0.40
codegen_flags: <defaults>
</compile_context>

<pallas_src>
import jax
import jax.numpy as jnp
from jax import lax
from jax.experimental import pallas as pl
from jax.experimental.pallas import tpu as pltpu

# ----- module hyper-parameters (NAS-Bench-201 cell: 6 edges, 5 ops) -----------
H = 32                  # lstm_size
H2 = 2 * H              # 64
H4 = 4 * H              # 128
NUM_OPS = 5
NUM_EDGE = 6
TEMPERATURE = 5.0
TANH_CONST = 2.5
INV_TEMPERATURE = 1.0 / TEMPERATURE

NP = 128                # num_ops padded to one vreg lane width
NEG = -1e30             # large finite negative (exp underflows to 0, no NaNs)

# ----- row layout of the packed f32 parameter slab (width = 128 lanes) --------
R_W0 = 0                        # (2H, 4H)  fused [Wih^T ; Whh^T] layer 0
R_W1 = R_W0 + H2                # 64        layer 1
R_WP = R_W1 + H2                # 128       (H, NP) head weight^T (lane padded)
R_B0 = R_WP + H                 # 160       (1, 4H) fused layer-0 bias
R_B1 = R_B0 + 1                 # 161
R_BP = R_B1 + 1                 # 162       (1, NP) head bias (lane padded)
R_X0 = R_BP + 1                 # 163       (1, NP) input_vars at lanes [0, H)
R_GU = R_X0 + 1                 # 164..169  per-edge gumbel rows (invalid=NEG)
SLAB_ROWS = 176                 # padded to a sublane multiple


def controller_kernel(slab_ref, embd_ref, lp_ref, ent_ref, arch_ref):
    f32 = jnp.float32
    bf16 = jnp.bfloat16

    lane = lax.broadcasted_iota(jnp.int32, (1, NP), 1)
    neg_mask = jnp.where(lane < NUM_OPS, 0.0, NEG)        # hoisted constant vreg

    # Hoist small, heavily reused weights into vregs; cast to bf16 once here,
    # outside the 6-step serial chain.
    w0 = slab_ref[R_W0:R_W0 + H2, :].astype(bf16)          # (2H, 4H)
    w1 = slab_ref[R_W1:R_W1 + H2, :].astype(bf16)          # (2H, 4H)
    wpred = slab_ref[R_WP:R_WP + H, :].astype(bf16)        # (H, NP)
    b0 = slab_ref[R_B0:R_B0 + 1, :]                        # (1, 4H) f32
    b1 = slab_ref[R_B1:R_B1 + 1, :]                        # (1, 4H) f32
    bpred = slab_ref[R_BP:R_BP + 1, :]                     # (1, NP) f32

    def lstm_cell(x, h, c, w_cat, b):
        # PyTorch nn.LSTM gate order: i, f, g, o.  One fused MXU op per cell.
        xh = jnp.concatenate([x, h], axis=-1).astype(bf16)            # (1, 2H)
        gates = jnp.dot(xh, w_cat, preferred_element_type=f32) + b    # (1, 4H)
        # Whole-vreg activations (2 EUP pushes), then slice the gates.
        sig = jax.nn.sigmoid(gates)
        tg = jnp.tanh(gates)
        i = sig[:, 0 * H:1 * H]
        f = sig[:, 1 * H:2 * H]
        g = tg[:, 2 * H:3 * H]
        o = sig[:, 3 * H:4 * H]
        c_new = f * c + i * g
        h_new = o * jnp.tanh(c_new)
        return h_new, c_new

    inp = slab_ref[R_X0:R_X0 + 1, 0:H]                     # (1, H) f32
    zeros = jnp.zeros((1, H), f32)
    h0, c0, h1, c1 = zeros, zeros, zeros, zeros
    lp = jnp.zeros((1, 1), f32)
    ent = jnp.zeros((1, 1), f32)

    # Sequentially dependent chain -> fully unrolled straight-line code.
    for e in range(NUM_EDGE):
        h0, c0 = lstm_cell(inp, h0, c0, w0, b0)
        h1, c1 = lstm_cell(h0, h1, c1, w1, b1)

        # linear head + temperature + tanh squash (math in f32)
        raw = jnp.dot(h1.astype(bf16), wpred, preferred_element_type=f32) + bpred
        squashed = TANH_CONST * jnp.tanh(raw * INV_TEMPERATURE)

        # Gumbel-max categorical sample; NEG is pre-baked into invalid lanes of
        # the gumbel row, so no mask sits between the matmul and the argmax.
        perturbed = squashed + slab_ref[R_GU + e:R_GU + e + 1, :]
        maxv = jnp.max(perturbed, axis=-1, keepdims=True)
        idx_vec = jnp.min(jnp.where(perturbed == maxv, lane, NP),
                          axis=-1, keepdims=True)          # (1, 1) int32
        idx = idx_vec[0, 0]                                 # single scalar extract
        arch_ref[e] = idx.astype(jnp.int32)

        # softmax pieces (additive mask; exp of ~NEG underflows to exactly 0)
        logits = squashed + neg_mask
        m = jnp.max(logits, axis=-1, keepdims=True)
        z = logits - m
        e_z = jnp.exp(z)
        s = jnp.sum(e_z, axis=-1, keepdims=True)
        log_s = jnp.log(s)
        inv_s = pl.reciprocal(s, approx=True)

        # log_prob of sampled op and entropy of the distribution (f32)
        sel = lane == idx_vec
        lp = lp + jnp.sum(jnp.where(sel, z, 0.0), axis=-1, keepdims=True) - log_s
        ent = ent + log_s - jnp.sum(e_z * z, axis=-1, keepdims=True) * inv_s

        # embedding feedback: scalar-indexed row gather (no MXU on this path)
        inp = embd_ref[pl.ds(idx, 1), :]                    # (1, H) f32

    lp_ref[...] = lp
    ent_ref[...] = ent


def make_params(key):
    ks = jax.random.split(key, 12)

    def u(k, shape, a=0.1):
        return jax.random.uniform(k, shape, jnp.float32, minval=-a, maxval=a)

    # deterministic synthetic init (shapes match the PyTorch module)
    return dict(
        input_vars=u(ks[0], (1, H)),                 # nn.Parameter (1,1,H) squeezed
        wih0=u(ks[1], (4 * H, H)),                   # w_lstm.weight_ih_l0
        whh0=u(ks[2], (4 * H, H)),                   # w_lstm.weight_hh_l0
        bih0=u(ks[3], (4 * H,)),
        bhh0=u(ks[4], (4 * H,)),
        wih1=u(ks[5], (4 * H, H)),                   # layer 1
        whh1=u(ks[6], (4 * H, H)),
        bih1=u(ks[7], (4 * H,)),
        bhh1=u(ks[8], (4 * H,)),
        wembd=u(ks[9], (NUM_OPS, H)),                # w_embd.weight
        wpred=u(ks[10], (NUM_OPS, H)),               # w_pred.weight
        bpred=u(ks[11], (NUM_OPS,)),                 # w_pred.bias
    )


def controller_forward(params, gumbel):
    """gumbel: (NUM_EDGE, NUM_OPS) f32 Gumbel(0,1) noise, one row per edge."""
    f32 = jnp.float32

    # Fused [Wih^T ; Whh^T] -> (2H, 4H); fused biases; lane-padded head/bias.
    w0 = jnp.concatenate([params["wih0"].T, params["whh0"].T], axis=0)
    w1 = jnp.concatenate([params["wih1"].T, params["whh1"].T], axis=0)
    b0 = (params["bih0"] + params["bhh0"]).reshape(1, H4)
    b1 = (params["bih1"] + params["bhh1"]).reshape(1, H4)
    wpredT = jnp.zeros((H, NP), f32).at[:, :NUM_OPS].set(params["wpred"].T)
    bpred = jnp.zeros((1, NP), f32).at[0, :NUM_OPS].set(params["bpred"])
    x0 = jnp.zeros((1, NP), f32).at[0, :H].set(params["input_vars"].reshape(H))

    # Gumbel rows padded to 128 lanes with NEG baked into invalid lanes so the
    # in-kernel sampling path needs no mask at all.
    g = jnp.full((NUM_EDGE, NP), NEG, f32).at[:, :NUM_OPS].set(
        gumbel[:, :NUM_OPS].astype(f32))

    # One lane-dense f32 parameter slab -> single prologue DMA.
    slab = jnp.zeros((SLAB_ROWS, NP), f32)
    slab = slab.at[R_W0:R_W0 + H2, :].set(w0)
    slab = slab.at[R_W1:R_W1 + H2, :].set(w1)
    slab = slab.at[R_WP:R_WP + H, :].set(wpredT)
    slab = slab.at[R_B0, :].set(b0[0])
    slab = slab.at[R_B1, :].set(b1[0])
    slab = slab.at[R_BP, :].set(bpred[0])
    slab = slab.at[R_X0, :].set(x0[0])
    slab = slab.at[R_GU:R_GU + NUM_EDGE, :].set(g)

    # Small (8, H) embedding table for the scalar-indexed row gather.
    embd = jnp.zeros((8, H), f32).at[:NUM_OPS, :].set(params["wembd"])

    vmem = pltpu.MemorySpace.VMEM
    smem = pltpu.MemorySpace.SMEM

    fn = pl.pallas_call(
        controller_kernel,
        out_shape=(
            jax.ShapeDtypeStruct((1, 1), f32),              # sum(log_probs)
            jax.ShapeDtypeStruct((1, 1), f32),              # sum(entropys)
            jax.ShapeDtypeStruct((NUM_EDGE,), jnp.int32),   # sampled_arch
        ),
        in_specs=[pl.BlockSpec(memory_space=vmem),
                  pl.BlockSpec(memory_space=vmem)],
        out_specs=(pl.BlockSpec(memory_space=vmem),
                   pl.BlockSpec(memory_space=vmem),
                   pl.BlockSpec(memory_space=smem)),
    )
    lp, ent, arch = fn(slab, embd)
    return lp[0, 0], ent[0, 0], arch


if __name__ == "__main__":
    key = jax.random.PRNGKey(0)
    k_params, k_gumbel = jax.random.split(key)
    params = make_params(k_params)

    # Gumbel noise for the categorical sampling (one row per edge).
    # Note: distributionally equivalent to torch.distributions.Categorical
    # sampling, but not a bitwise reproduction of the PyTorch RNG stream.
    u = jax.random.uniform(k_gumbel, (NUM_EDGE, NUM_OPS), jnp.float32,
                           minval=1e-6, maxval=1.0 - 1e-6)
    gumbel = -jnp.log(-jnp.log(u))

    lp_sum, ent_sum, sampled_arch = controller_forward(params, gumbel)
    jax.block_until_ready((lp_sum, ent_sum, sampled_arch))

    assert bool(jnp.isfinite(lp_sum)) and bool(jnp.isfinite(ent_sum))
    assert bool(jnp.all((sampled_arch >= 0) & (sampled_arch < NUM_OPS)))
    print("KERNEL_OK")
</pallas_src>

<mosaic_0001>
module attributes {stable_mosaic.version = 11 : i64} {
  func.func @controller_kernel(%arg0: memref<176x128xf32, #tpu.memory_space<vmem>>, %arg1: memref<8x32xf32, #tpu.memory_space<vmem>>, %arg2: memref<1x1xf32, #tpu.memory_space<vmem>>, %arg3: memref<1x1xf32, #tpu.memory_space<vmem>>, %arg4: memref<6xi32, #tpu.memory_space<smem>>) attributes {dimension_semantics = [], scalar_prefetch = 0 : i64, scratch_operands = 0 : i64, tpu.core_type = #tpu.core_type<tc>} {
    %0 = tpu.iota {dimensions = array<i32: 1>} : vector<1x128xi32>
    %c5_i32 = arith.constant 5 : i32
    %1 = vector.broadcast %c5_i32 : i32 to vector<1x128xi32>
    %2 = arith.cmpi slt, %0, %1 : vector<1x128xi32>
    %cst = arith.constant 0.000000e+00 : f32
    %cst_0 = arith.constant -1.000000e+30 : f32
    %3 = vector.broadcast %cst : f32 to vector<1x128xf32>
    %4 = vector.broadcast %cst_0 : f32 to vector<1x128xf32>
    %5 = arith.select %2, %3, %4 : vector<1x128xi1>, vector<1x128xf32>
    %c0 = arith.constant 0 : index
    %c0_1 = arith.constant 0 : index
    %6 = vector.load %arg0[%c0, %c0_1] : memref<176x128xf32, #tpu.memory_space<vmem>>, vector<64x128xf32>
    %7 = arith.truncf %6 : vector<64x128xf32> to vector<64x128xbf16>
    %c64 = arith.constant 64 : index
    %c0_2 = arith.constant 0 : index
    %8 = vector.load %arg0[%c64, %c0_2] : memref<176x128xf32, #tpu.memory_space<vmem>>, vector<64x128xf32>
    %9 = arith.truncf %8 : vector<64x128xf32> to vector<64x128xbf16>
    %c128 = arith.constant 128 : index
    %c0_3 = arith.constant 0 : index
    %10 = vector.load %arg0[%c128, %c0_3] : memref<176x128xf32, #tpu.memory_space<vmem>>, vector<32x128xf32>
    %11 = arith.truncf %10 : vector<32x128xf32> to vector<32x128xbf16>
    %c160 = arith.constant 160 : index
    %c0_4 = arith.constant 0 : index
    %12 = vector.load %arg0[%c160, %c0_4] : memref<176x128xf32, #tpu.memory_space<vmem>>, vector<1x128xf32>
    %c161 = arith.constant 161 : index
    %c0_5 = arith.constant 0 : index
    %13 = vector.load %arg0[%c161, %c0_5] : memref<176x128xf32, #tpu.memory_space<vmem>>, vector<1x128xf32>
    %c162 = arith.constant 162 : index
    %c0_6 = arith.constant 0 : index
    %14 = vector.load %arg0[%c162, %c0_6] : memref<176x128xf32, #tpu.memory_space<vmem>>, vector<1x128xf32>
    %c163 = arith.constant 163 : index
    %c0_7 = arith.constant 0 : index
    %15 = vector.load %arg0[%c163, %c0_7] : memref<176x128xf32, #tpu.memory_space<vmem>>, vector<1x32xf32>
    %cst_8 = arith.constant 0.000000e+00 : f32
    %16 = vector.broadcast %cst_8 : f32 to vector<1x32xf32>
    %cst_9 = arith.constant 0.000000e+00 : f32
    %17 = vector.broadcast %cst_9 : f32 to vector<1x1xf32>
    %cst_10 = arith.constant 0.000000e+00 : f32
    %18 = vector.broadcast %cst_10 : f32 to vector<1x1xf32>
    %19 = tpu.concatenate %15, %16 in 1 : vector<1x32xf32>, vector<1x32xf32> -> vector<1x64xf32>
    %20 = arith.truncf %19 : vector<1x64xf32> to vector<1x64xbf16>
    %cst_11 = arith.constant dense<0.000000e+00> : vector<1x128xf32>
    %21 = tpu.matmul %20, %7, %cst_11 {dimension_numbers = #tpu.dot_dimension_numbers<[1], [0], [0], [1], [0, 0, 1, 1], [], []>} : vector<1x64xbf16>, vector<64x128xbf16>, vector<1x128xf32> -> vector<1x128xf32>
    %22 = arith.addf %21, %12 : vector<1x128xf32>
    %23 = arith.negf %22 : vector<1x128xf32>
    %24 = math.exp %23 : vector<1x128xf32>
    %cst_12 = arith.constant 1.000000e+00 : f32
    %25 = vector.broadcast %cst_12 : f32 to vector<1x128xf32>
    %26 = arith.addf %25, %24 : vector<1x128xf32>
    %27 = arith.divf %25, %26 : vector<1x128xf32>
    %28 = math.tanh %22 : vector<1x128xf32>
    %29 = vector.extract_strided_slice %27 {offsets = [0, 0], sizes = [1, 32], strides = [1, 1]} : vector<1x128xf32> to vector<1x32xf32>
    %30 = vector.extract_strided_slice %27 {offsets = [0, 32], sizes = [1, 32], strides = [1, 1]} : vector<1x128xf32> to vector<1x32xf32>
    %31 = vector.extract_strided_slice %28 {offsets = [0, 64], sizes = [1, 32], strides = [1, 1]} : vector<1x128xf32> to vector<1x32xf32>
    %32 = vector.extract_strided_slice %27 {offsets = [0, 96], sizes = [1, 32], strides = [1, 1]} : vector<1x128xf32> to vector<1x32xf32>
    %33 = arith.mulf %30, %16 : vector<1x32xf32>
    %34 = arith.mulf %29, %31 : vector<1x32xf32>
    %35 = arith.addf %33, %34 : vector<1x32xf32>
    %36 = math.tanh %35 : vector<1x32xf32>
    %37 = arith.mulf %32, %36 : vector<1x32xf32>
    %38 = tpu.concatenate %37, %16 in 1 : vector<1x32xf32>, vector<1x32xf32> -> vector<1x64xf32>
    %39 = arith.truncf %38 : vector<1x64xf32> to vector<1x64xbf16>
    %cst_13 = arith.constant dense<0.000000e+00> : vector<1x128xf32>
    %40 = tpu.matmul %39, %9, %cst_13 {dimension_numbers = #tpu.dot_dimension_numbers<[1], [0], [0], [1], [0, 0, 1, 1], [], []>} : vector<1x64xbf16>, vector<64x128xbf16>, vector<1x128xf32> -> vector<1x128xf32>
    %41 = arith.addf %40, %13 : vector<1x128xf32>
    %42 = arith.negf %41 : vector<1x128xf32>
    %43 = math.exp %42 : vector<1x128xf32>
    %cst_14 = arith.constant 1.000000e+00 : f32
    %44 = vector.broadcast %cst_14 : f32 to vector<1x128xf32>
    %45 = arith.addf %44, %43 : vector<1x128xf32>
    %46 = arith.divf %44, %45 : vector<1x128xf32>
    %47 = math.tanh %41 : vector<1x128xf32>
    %48 = vector.extract_strided_slice %46 {offsets = [0, 0], sizes = [1, 32], strides = [1, 1]} : vector<1x128xf32> to vector<1x32xf32>
    %49 = vector.extract_strided_slice %46 {offsets = [0, 32], sizes = [1, 32], strides = [1, 1]} : vector<1x128xf32> to vector<1x32xf32>
    %50 = vector.extract_strided_slice %47 {offsets = [0, 64], sizes = [1, 32], strides = [1, 1]} : vector<1x128xf32> to vector<1x32xf32>
    %51 = vector.extract_strided_slice %46 {offsets = [0, 96], sizes = [1, 32], strides = [1, 1]} : vector<1x128xf32> to vector<1x32xf32>
    %52 = arith.mulf %49, %16 : vector<1x32xf32>
    %53 = arith.mulf %48, %50 : vector<1x32xf32>
    %54 = arith.addf %52, %53 : vector<1x32xf32>
    %55 = math.tanh %54 : vector<1x32xf32>
    %56 = arith.mulf %51, %55 : vector<1x32xf32>
    %57 = arith.truncf %56 : vector<1x32xf32> to vector<1x32xbf16>
    %cst_15 = arith.constant dense<0.000000e+00> : vector<1x128xf32>
    %58 = tpu.matmul %57, %11, %cst_15 {dimension_numbers = #tpu.dot_dimension_numbers<[1], [0], [0], [1], [0, 0, 1, 1], [], []>} : vector<1x32xbf16>, vector<32x128xbf16>, vector<1x128xf32> -> vector<1x128xf32>
    %59 = arith.addf %58, %14 : vector<1x128xf32>
    %cst_16 = arith.constant 2.000000e-01 : f32
    %60 = vector.broadcast %cst_16 : f32 to vector<1x128xf32>
    %61 = arith.mulf %59, %60 : vector<1x128xf32>
    %62 = math.tanh %61 : vector<1x128xf32>
    %cst_17 = arith.constant 2.500000e+00 : f32
    %63 = vector.broadcast %cst_17 : f32 to vector<1x128xf32>
    %64 = arith.mulf %63, %62 : vector<1x128xf32>
    %c164 = arith.constant 164 : index
    %c0_18 = arith.constant 0 : index
    %65 = vector.load %arg0[%c164, %c0_18] : memref<176x128xf32, #tpu.memory_space<vmem>>, vector<1x128xf32>
    %66 = arith.addf %64, %65 : vector<1x128xf32>
    %cst_19 = arith.constant dense<0xFF800000> : vector<1xf32>
    %67 = vector.multi_reduction <maximumf>, %66, %cst_19 [1] : vector<1x128xf32> to vector<1xf32>
    %68 = vector.shape_cast %67 : vector<1xf32> to vector<1x1xf32>
    %69 = vector.broadcast %68 : vector<1x1xf32> to vector<1x128xf32>
    %70 = arith.cmpf oeq, %66, %69 : vector<1x128xf32>
    %c128_i32 = arith.constant 128 : i32
    %71 = vector.broadcast %c128_i32 : i32 to vector<1x128xi32>
    %72 = arith.select %70, %0, %71 : vector<1x128xi1>, vector<1x128xi32>
    %cst_20 = arith.constant dense<2147483647> : vector<1xi32>
    %73 = vector.multi_reduction <minsi>, %72, %cst_20 [1] : vector<1x128xi32> to vector<1xi32>
    %74 = vector.shape_cast %73 : vector<1xi32> to vector<1x1xi32>
    %75 = vector.extract %74[0, 0] : i32 from vector<1x1xi32>
    %c0_21 = arith.constant 0 : index
    %76 = memref.load %arg4[%c0_21] : memref<6xi32, #tpu.memory_space<smem>>
    memref.store %75, %arg4[%c0_21] : memref<6xi32, #tpu.memory_space<smem>>
    %77 = arith.addf %64, %5 : vector<1x128xf32>
    %cst_22 = arith.constant dense<0xFF800000> : vector<1xf32>
    %78 = vector.multi_reduction <maximumf>, %77, %cst_22 [1] : vector<1x128xf32> to vector<1xf32>
    %79 = vector.shape_cast %78 : vector<1xf32> to vector<1x1xf32>
    %80 = vector.broadcast %79 : vector<1x1xf32> to vector<1x128xf32>
    %81 = arith.subf %77, %80 : vector<1x128xf32>
    %82 = math.exp %81 : vector<1x128xf32>
    %cst_23 = arith.constant dense<0.000000e+00> : vector<1xf32>
    %83 = vector.multi_reduction <add>, %82, %cst_23 [1] : vector<1x128xf32> to vector<1xf32>
    %84 = vector.shape_cast %83 : vector<1xf32> to vector<1x1xf32>
    %85 = math.log %84 : vector<1x1xf32>
    %86 = tpu.reciprocal %84 {approx = true} : vector<1x1xf32> -> vector<1x1xf32>
    %87 = vector.broadcast %74 : vector<1x1xi32> to vector<1x128xi32>
    %88 = arith.cmpi eq, %0, %87 : vector<1x128xi32>
    %cst_24 = arith.constant 0.000000e+00 : f32
    %89 = vector.broadcast %cst_24 : f32 to vector<1x128xf32>
    %90 = arith.select %88, %81, %89 : vector<1x128xi1>, vector<1x128xf32>
    %cst_25 = arith.constant dense<0.000000e+00> : vector<1xf32>
    %91 = vector.multi_reduction <add>, %90, %cst_25 [1] : vector<1x128xf32> to vector<1xf32>
    %92 = vector.shape_cast %91 : vector<1xf32> to vector<1x1xf32>
    %93 = arith.addf %17, %92 : vector<1x1xf32>
    %94 = arith.subf %93, %85 : vector<1x1xf32>
    %95 = arith.addf %18, %85 : vector<1x1xf32>
    %96 = arith.mulf %82, %81 : vector<1x128xf32>
    %cst_26 = arith.constant dense<0.000000e+00> : vector<1xf32>
    %97 = vector.multi_reduction <add>, %96, %cst_26 [1] : vector<1x128xf32> to vector<1xf32>
    %98 = vector.shape_cast %97 : vector<1xf32> to vector<1x1xf32>
    %99 = arith.mulf %98, %86 : vector<1x1xf32>
    %100 = arith.subf %95, %99 : vector<1x1xf32>
    %101 = arith.index_cast %75 : i32 to index
    %c0_27 = arith.constant 0 : index
    %102 = vector.load %arg1[%101, %c0_27] : memref<8x32xf32, #tpu.memory_space<vmem>>, vector<1x32xf32>
    %103 = tpu.concatenate %102, %37 in 1 : vector<1x32xf32>, vector<1x32xf32> -> vector<1x64xf32>
    %104 = arith.truncf %103 : vector<1x64xf32> to vector<1x64xbf16>
    %cst_28 = arith.constant dense<0.000000e+00> : vector<1x128xf32>
    %105 = tpu.matmul %104, %7, %cst_28 {dimension_numbers = #tpu.dot_dimension_numbers<[1], [0], [0], [1], [0, 0, 1, 1], [], []>} : vector<1x64xbf16>, vector<64x128xbf16>, vector<1x128xf32> -> vector<1x128xf32>
    %106 = arith.addf %105, %12 : vector<1x128xf32>
    %107 = arith.negf %106 : vector<1x128xf32>
    %108 = math.exp %107 : vector<1x128xf32>
    %cst_29 = arith.constant 1.000000e+00 : f32
    %109 = vector.broadcast %cst_29 : f32 to vector<1x128xf32>
    %110 = arith.addf %109, %108 : vector<1x128xf32>
    %111 = arith.divf %109, %110 : vector<1x128xf32>
    %112 = math.tanh %106 : vector<1x128xf32>
    %113 = vector.extract_strided_slice %111 {offsets = [0, 0], sizes = [1, 32], strides = [1, 1]} : vector<1x128xf32> to vector<1x32xf32>
    %114 = vector.extract_strided_slice %111 {offsets = [0, 32], sizes = [1, 32], strides = [1, 1]} : vector<1x128xf32> to vector<1x32xf32>
    %115 = vector.extract_strided_slice %112 {offsets = [0, 64], sizes = [1, 32], strides = [1, 1]} : vector<1x128xf32> to vector<1x32xf32>
    %116 = vector.extract_strided_slice %111 {offsets = [0, 96], sizes = [1, 32], strides = [1, 1]} : vector<1x128xf32> to vector<1x32xf32>
    %117 = arith.mulf %114, %35 : vector<1x32xf32>
    %118 = arith.mulf %113, %115 : vector<1x32xf32>
    %119 = arith.addf %117, %118 : vector<1x32xf32>
    %120 = math.tanh %119 : vector<1x32xf32>
    %121 = arith.mulf %116, %120 : vector<1x32xf32>
    %122 = tpu.concatenate %121, %56 in 1 : vector<1x32xf32>, vector<1x32xf32> -> vector<1x64xf32>
    %123 = arith.truncf %122 : vector<1x64xf32> to vector<1x64xbf16>
    %cst_30 = arith.constant dense<0.000000e+00> : vector<1x128xf32>
    %124 = tpu.matmul %123, %9, %cst_30 {dimension_numbers = #tpu.dot_dimension_numbers<[1], [0], [0], [1], [0, 0, 1, 1], [], []>} : vector<1x64xbf16>, vector<64x128xbf16>, vector<1x128xf32> -> vector<1x128xf32>
    %125 = arith.addf %124, %13 : vector<1x128xf32>
    %126 = arith.negf %125 : vector<1x128xf32>
    %127 = math.exp %126 : vector<1x128xf32>
    %cst_31 = arith.constant 1.000000e+00 : f32
    %128 = vector.broadcast %cst_31 : f32 to vector<1x128xf32>
    %129 = arith.addf %128, %127 : vector<1x128xf32>
    %130 = arith.divf %128, %129 : vector<1x128xf32>
    %131 = math.tanh %125 : vector<1x128xf32>
    %132 = vector.extract_strided_slice %130 {offsets = [0, 0], sizes = [1, 32], strides = [1, 1]} : vector<1x128xf32> to vector<1x32xf32>
    %133 = vector.extract_strided_slice %130 {offsets = [0, 32], sizes = [1, 32], strides = [1, 1]} : vector<1x128xf32> to vector<1x32xf32>
    %134 = vector.extract_strided_slice %131 {offsets = [0, 64], sizes = [1, 32], strides = [1, 1]} : vector<1x128xf32> to vector<1x32xf32>
    %135 = vector.extract_strided_slice %130 {offsets = [0, 96], sizes = [1, 32], strides = [1, 1]} : vector<1x128xf32> to vector<1x32xf32>
    %136 = arith.mulf %133, %54 : vector<1x32xf32>
    %137 = arith.mulf %132, %134 : vector<1x32xf32>
    %138 = arith.addf %136, %137 : vector<1x32xf32>
    %139 = math.tanh %138 : vector<1x32xf32>
    %140 = arith.mulf %135, %139 : vector<1x32xf32>
    %141 = arith.truncf %140 : vector<1x32xf32> to vector<1x32xbf16>
    %cst_32 = arith.constant dense<0.000000e+00> : vector<1x128xf32>
    %142 = tpu.matmul %141, %11, %cst_32 {dimension_numbers = #tpu.dot_dimension_numbers<[1], [0], [0], [1], [0, 0, 1, 1], [], []>} : vector<1x32xbf16>, vector<32x128xbf16>, vector<1x128xf32> -> vector<1x128xf32>
    %143 = arith.addf %142, %14 : vector<1x128xf32>
    %cst_33 = arith.constant 2.000000e-01 : f32
    %144 = vector.broadcast %cst_33 : f32 to vector<1x128xf32>
    %145 = arith.mulf %143, %144 : vector<1x128xf32>
    %146 = math.tanh %145 : vector<1x128xf32>
    %cst_34 = arith.constant 2.500000e+00 : f32
    %147 = vector.broadcast %cst_34 : f32 to vector<1x128xf32>
    %148 = arith.mulf %147, %146 : vector<1x128xf32>
    %c165 = arith.constant 165 : index
    %c0_35 = arith.constant 0 : index
    %149 = vector.load %arg0[%c165, %c0_35] : memref<176x128xf32, #tpu.memory_space<vmem>>, vector<1x128xf32>
    %150 = arith.addf %148, %149 : vector<1x128xf32>
    %cst_36 = arith.constant dense<0xFF800000> : vector<1xf32>
    %151 = vector.multi_reduction <maximumf>, %150, %cst_36 [1] : vector<1x128xf32> to vector<1xf32>
    %152 = vector.shape_cast %151 : vector<1xf32> to vector<1x1xf32>
    %153 = vector.broadcast %152 : vector<1x1xf32> to vector<1x128xf32>
    %154 = arith.cmpf oeq, %150, %153 : vector<1x128xf32>
    %c128_i32_37 = arith.constant 128 : i32
    %155 = vector.broadcast %c128_i32_37 : i32 to vector<1x128xi32>
    %156 = arith.select %154, %0, %155 : vector<1x128xi1>, vector<1x128xi32>
    %cst_38 = arith.constant dense<2147483647> : vector<1xi32>
    %157 = vector.multi_reduction <minsi>, %156, %cst_38 [1] : vector<1x128xi32> to vector<1xi32>
    %158 = vector.shape_cast %157 : vector<1xi32> to vector<1x1xi32>
    %159 = vector.extract %158[0, 0] : i32 from vector<1x1xi32>
    %c1 = arith.constant 1 : index
    %160 = memref.load %arg4[%c1] : memref<6xi32, #tpu.memory_space<smem>>
    memref.store %159, %arg4[%c1] : memref<6xi32, #tpu.memory_space<smem>>
    %161 = arith.addf %148, %5 : vector<1x128xf32>
    %cst_39 = arith.constant dense<0xFF800000> : vector<1xf32>
    %162 = vector.multi_reduction <maximumf>, %161, %cst_39 [1] : vector<1x128xf32> to vector<1xf32>
    %163 = vector.shape_cast %162 : vector<1xf32> to vector<1x1xf32>
    %164 = vector.broadcast %163 : vector<1x1xf32> to vector<1x128xf32>
    %165 = arith.subf %161, %164 : vector<1x128xf32>
    %166 = math.exp %165 : vector<1x128xf32>
    %cst_40 = arith.constant dense<0.000000e+00> : vector<1xf32>
    %167 = vector.multi_reduction <add>, %166, %cst_40 [1] : vector<1x128xf32> to vector<1xf32>
    %168 = vector.shape_cast %167 : vector<1xf32> to vector<1x1xf32>
    %169 = math.log %168 : vector<1x1xf32>
    %170 = tpu.reciprocal %168 {approx = true} : vector<1x1xf32> -> vector<1x1xf32>
    %171 = vector.broadcast %158 : vector<1x1xi32> to vector<1x128xi32>
    %172 = arith.cmpi eq, %0, %171 : vector<1x128xi32>
    %cst_41 = arith.constant 0.000000e+00 : f32
    %173 = vector.broadcast %cst_41 : f32 to vector<1x128xf32>
    %174 = arith.select %172, %165, %173 : vector<1x128xi1>, vector<1x128xf32>
    %cst_42 = arith.constant dense<0.000000e+00> : vector<1xf32>
    %175 = vector.multi_reduction <add>, %174, %cst_42 [1] : vector<1x128xf32> to vector<1xf32>
    %176 = vector.shape_cast %175 : vector<1xf32> to vector<1x1xf32>
    %177 = arith.addf %94, %176 : vector<1x1xf32>
    %178 = arith.subf %177, %169 : vector<1x1xf32>
    %179 = arith.addf %100, %169 : vector<1x1xf32>
    %180 = arith.mulf %166, %165 : vector<1x128xf32>
    %cst_43 = arith.constant dense<0.000000e+00> : vector<1xf32>
    %181 = vector.multi_reduction <add>, %180, %cst_43 [1] : vector<1x128xf32> to vector<1xf32>
    %182 = vector.shape_cast %181 : vector<1xf32> to vector<1x1xf32>
    %183 = arith.mulf %182, %170 : vector<1x1xf32>
    %184 = arith.subf %179, %183 : vector<1x1xf32>
    %185 = arith.index_cast %159 : i32 to index
    %c0_44 = arith.constant 0 : index
    %186 = vector.load %arg1[%185, %c0_44] : memref<8x32xf32, #tpu.memory_space<vmem>>, vector<1x32xf32>
    %187 = tpu.concatenate %186, %121 in 1 : vector<1x32xf32>, vector<1x32xf32> -> vector<1x64xf32>
    %188 = arith.truncf %187 : vector<1x64xf32> to vector<1x64xbf16>
    %cst_45 = arith.constant dense<0.000000e+00> : vector<1x128xf32>
    %189 = tpu.matmul %188, %7, %cst_45 {dimension_numbers = #tpu.dot_dimension_numbers<[1], [0], [0], [1], [0, 0, 1, 1], [], []>} : vector<1x64xbf16>, vector<64x128xbf16>, vector<1x128xf32> -> vector<1x128xf32>
    %190 = arith.addf %189, %12 : vector<1x128xf32>
    %191 = arith.negf %190 : vector<1x128xf32>
    %192 = math.exp %191 : vector<1x128xf32>
    %cst_46 = arith.constant 1.000000e+00 : f32
    %193 = vector.broadcast %cst_46 : f32 to vector<1x128xf32>
    %194 = arith.addf %193, %192 : vector<1x128xf32>
    %195 = arith.divf %193, %194 : vector<1x128xf32>
    %196 = math.tanh %190 : vector<1x128xf32>
    %197 = vector.extract_strided_slice %195 {offsets = [0, 0], sizes = [1, 32], strides = [1, 1]} : vector<1x128xf32> to vector<1x32xf32>
    %198 = vector.extract_strided_slice %195 {offsets = [0, 32], sizes = [1, 32], strides = [1, 1]} : vector<1x128xf32> to vector<1x32xf32>
    %199 = vector.extract_strided_slice %196 {offsets = [0, 64], sizes = [1, 32], strides = [1, 1]} : vector<1x128xf32> to vector<1x32xf32>
    %200 = vector.extract_strided_slice %195 {offsets = [0, 96], sizes = [1, 32], strides = [1, 1]} : vector<1x128xf32> to vector<1x32xf32>
    %201 = arith.mulf %198, %119 : vector<1x32xf32>
    %202 = arith.mulf %197, %199 : vector<1x32xf32>
    %203 = arith.addf %201, %202 : vector<1x32xf32>
    %204 = math.tanh %203 : vector<1x32xf32>
    %205 = arith.mulf %200, %204 : vector<1x32xf32>
    %206 = tpu.concatenate %205, %140 in 1 : vector<1x32xf32>, vector<1x32xf32> -> vector<1x64xf32>
    %207 = arith.truncf %206 : vector<1x64xf32> to vector<1x64xbf16>
    %cst_47 = arith.constant dense<0.000000e+00> : vector<1x128xf32>
    %208 = tpu.matmul %207, %9, %cst_47 {dimension_numbers = #tpu.dot_dimension_numbers<[1], [0], [0], [1], [0, 0, 1, 1], [], []>} : vector<1x64xbf16>, vector<64x128xbf16>, vector<1x128xf32> -> vector<1x128xf32>
    %209 = arith.addf %208, %13 : vector<1x128xf32>
    %210 = arith.negf %209 : vector<1x128xf32>
    %211 = math.exp %210 : vector<1x128xf32>
    %cst_48 = arith.constant 1.000000e+00 : f32
    %212 = vector.broadcast %cst_48 : f32 to vector<1x128xf32>
    %213 = arith.addf %212, %211 : vector<1x128xf32>
    %214 = arith.divf %212, %213 : vector<1x128xf32>
    %215 = math.tanh %209 : vector<1x128xf32>
    %216 = vector.extract_strided_slice %214 {offsets = [0, 0], sizes = [1, 32], strides = [1, 1]} : vector<1x128xf32> to vector<1x32xf32>
    %217 = vector.extract_strided_slice %214 {offsets = [0, 32], sizes = [1, 32], strides = [1, 1]} : vector<1x128xf32> to vector<1x32xf32>
    %218 = vector.extract_strided_slice %215 {offsets = [0, 64], sizes = [1, 32], strides = [1, 1]} : vector<1x128xf32> to vector<1x32xf32>
    %219 = vector.extract_strided_slice %214 {offsets = [0, 96], sizes = [1, 32], strides = [1, 1]} : vector<1x128xf32> to vector<1x32xf32>
    %220 = arith.mulf %217, %138 : vector<1x32xf32>
    %221 = arith.mulf %216, %218 : vector<1x32xf32>
    %222 = arith.addf %220, %221 : vector<1x32xf32>
    %223 = math.tanh %222 : vector<1x32xf32>
    %224 = arith.mulf %219, %223 : vector<1x32xf32>
    %225 = arith.truncf %224 : vector<1x32xf32> to vector<1x32xbf16>
    %cst_49 = arith.constant dense<0.000000e+00> : vector<1x128xf32>
    %226 = tpu.matmul %225, %11, %cst_49 {dimension_numbers = #tpu.dot_dimension_numbers<[1], [0], [0], [1], [0, 0, 1, 1], [], []>} : vector<1x32xbf16>, vector<32x128xbf16>, vector<1x128xf32> -> vector<1x128xf32>
    %227 = arith.addf %226, %14 : vector<1x128xf32>
    %cst_50 = arith.constant 2.000000e-01 : f32
    %228 = vector.broadcast %cst_50 : f32 to vector<1x128xf32>
    %229 = arith.mulf %227, %228 : vector<1x128xf32>
    %230 = math.tanh %229 : vector<1x128xf32>
    %cst_51 = arith.constant 2.500000e+00 : f32
    %231 = vector.broadcast %cst_51 : f32 to vector<1x128xf32>
    %232 = arith.mulf %231, %230 : vector<1x128xf32>
    %c166 = arith.constant 166 : index
    %c0_52 = arith.constant 0 : index
    %233 = vector.load %arg0[%c166, %c0_52] : memref<176x128xf32, #tpu.memory_space<vmem>>, vector<1x128xf32>
    %234 = arith.addf %232, %233 : vector<1x128xf32>
    %cst_53 = arith.constant dense<0xFF800000> : vector<1xf32>
    %235 = vector.multi_reduction <maximumf>, %234, %cst_53 [1] : vector<1x128xf32> to vector<1xf32>
    %236 = vector.shape_cast %235 : vector<1xf32> to vector<1x1xf32>
    %237 = vector.broadcast %236 : vector<1x1xf32> to vector<1x128xf32>
    %238 = arith.cmpf oeq, %234, %237 : vector<1x128xf32>
    %c128_i32_54 = arith.constant 128 : i32
    %239 = vector.broadcast %c128_i32_54 : i32 to vector<1x128xi32>
    %240 = arith.select %238, %0, %239 : vector<1x128xi1>, vector<1x128xi32>
    %cst_55 = arith.constant dense<2147483647> : vector<1xi32>
    %241 = vector.multi_reduction <minsi>, %240, %cst_55 [1] : vector<1x128xi32> to vector<1xi32>
    %242 = vector.shape_cast %241 : vector<1xi32> to vector<1x1xi32>
    %243 = vector.extract %242[0, 0] : i32 from vector<1x1xi32>
    %c2 = arith.constant 2 : index
    %244 = memref.load %arg4[%c2] : memref<6xi32, #tpu.memory_space<smem>>
    memref.store %243, %arg4[%c2] : memref<6xi32, #tpu.memory_space<smem>>
    %245 = arith.addf %232, %5 : vector<1x128xf32>
    %cst_56 = arith.constant dense<0xFF800000> : vector<1xf32>
    %246 = vector.multi_reduction <maximumf>, %245, %cst_56 [1] : vector<1x128xf32> to vector<1xf32>
    %247 = vector.shape_cast %246 : vector<1xf32> to vector<1x1xf32>
    %248 = vector.broadcast %247 : vector<1x1xf32> to vector<1x128xf32>
    %249 = arith.subf %245, %248 : vector<1x128xf32>
    %250 = math.exp %249 : vector<1x128xf32>
    %cst_57 = arith.constant dense<0.000000e+00> : vector<1xf32>
    %251 = vector.multi_reduction <add>, %250, %cst_57 [1] : vector<1x128xf32> to vector<1xf32>
    %252 = vector.shape_cast %251 : vector<1xf32> to vector<1x1xf32>
    %253 = math.log %252 : vector<1x1xf32>
    %254 = tpu.reciprocal %252 {approx = true} : vector<1x1xf32> -> vector<1x1xf32>
    %255 = vector.broadcast %242 : vector<1x1xi32> to vector<1x128xi32>
    %256 = arith.cmpi eq, %0, %255 : vector<1x128xi32>
    %cst_58 = arith.constant 0.000000e+00 : f32
    %257 = vector.broadcast %cst_58 : f32 to vector<1x128xf32>
    %258 = arith.select %256, %249, %257 : vector<1x128xi1>, vector<1x128xf32>
    %cst_59 = arith.constant dense<0.000000e+00> : vector<1xf32>
    %259 = vector.multi_reduction <add>, %258, %cst_59 [1] : vector<1x128xf32> to vector<1xf32>
    %260 = vector.shape_cast %259 : vector<1xf32> to vector<1x1xf32>
    %261 = arith.addf %178, %260 : vector<1x1xf32>
    %262 = arith.subf %261, %253 : vector<1x1xf32>
    %263 = arith.addf %184, %253 : vector<1x1xf32>
    %264 = arith.mulf %250, %249 : vector<1x128xf32>
    %cst_60 = arith.constant dense<0.000000e+00> : vector<1xf32>
    %265 = vector.multi_reduction <add>, %264, %cst_60 [1] : vector<1x128xf32> to vector<1xf32>
    %266 = vector.shape_cast %265 : vector<1xf32> to vector<1x1xf32>
    %267 = arith.mulf %266, %254 : vector<1x1xf32>
    %268 = arith.subf %263, %267 : vector<1x1xf32>
    %269 = arith.index_cast %243 : i32 to index
    %c0_61 = arith.constant 0 : index
    %270 = vector.load %arg1[%269, %c0_61] : memref<8x32xf32, #tpu.memory_space<vmem>>, vector<1x32xf32>
    %271 = tpu.concatenate %270, %205 in 1 : vector<1x32xf32>, vector<1x32xf32> -> vector<1x64xf32>
    %272 = arith.truncf %271 : vector<1x64xf32> to vector<1x64xbf16>
    %cst_62 = arith.constant dense<0.000000e+00> : vector<1x128xf32>
    %273 = tpu.matmul %272, %7, %cst_62 {dimension_numbers = #tpu.dot_dimension_numbers<[1], [0], [0], [1], [0, 0, 1, 1], [], []>} : vector<1x64xbf16>, vector<64x128xbf16>, vector<1x128xf32> -> vector<1x128xf32>
    %274 = arith.addf %273, %12 : vector<1x128xf32>
    %275 = arith.negf %274 : vector<1x128xf32>
    %276 = math.exp %275 : vector<1x128xf32>
    %cst_63 = arith.constant 1.000000e+00 : f32
    %277 = vector.broadcast %cst_63 : f32 to vector<1x128xf32>
    %278 = arith.addf %277, %276 : vector<1x128xf32>
    %279 = arith.divf %277, %278 : vector<1x128xf32>
    %280 = math.tanh %274 : vector<1x128xf32>
    %281 = vector.extract_strided_slice %279 {offsets = [0, 0], sizes = [1, 32], strides = [1, 1]} : vector<1x128xf32> to vector<1x32xf32>
    %282 = vector.extract_strided_slice %279 {offsets = [0, 32], sizes = [1, 32], strides = [1, 1]} : vector<1x128xf32> to vector<1x32xf32>
    %283 = vector.extract_strided_slice %280 {offsets = [0, 64], sizes = [1, 32], strides = [1, 1]} : vector<1x128xf32> to vector<1x32xf32>
    %284 = vector.extract_strided_slice %279 {offsets = [0, 96], sizes = [1, 32], strides = [1, 1]} : vector<1x128xf32> to vector<1x32xf32>
    %285 = arith.mulf %282, %203 : vector<1x32xf32>
    %286 = arith.mulf %281, %283 : vector<1x32xf32>
    %287 = arith.addf %285, %286 : vector<1x32xf32>
    %288 = math.tanh %287 : vector<1x32xf32>
    %289 = arith.mulf %284, %288 : vector<1x32xf32>
    %290 = tpu.concatenate %289, %224 in 1 : vector<1x32xf32>, vector<1x32xf32> -> vector<1x64xf32>
    %291 = arith.truncf %290 : vector<1x64xf32> to vector<1x64xbf16>
    %cst_64 = arith.constant dense<0.000000e+00> : vector<1x128xf32>
    %292 = tpu.matmul %291, %9, %cst_64 {dimension_numbers = #tpu.dot_dimension_numbers<[1], [0], [0], [1], [0, 0, 1, 1], [], []>} : vector<1x64xbf16>, vector<64x128xbf16>, vector<1x128xf32> -> vector<1x128xf32>
    %293 = arith.addf %292, %13 : vector<1x128xf32>
    %294 = arith.negf %293 : vector<1x128xf32>
    %295 = math.exp %294 : vector<1x128xf32>
    %cst_65 = arith.constant 1.000000e+00 : f32
    %296 = vector.broadcast %cst_65 : f32 to vector<1x128xf32>
    %297 = arith.addf %296, %295 : vector<1x128xf32>
    %298 = arith.divf %296, %297 : vector<1x128xf32>
    %299 = math.tanh %293 : vector<1x128xf32>
    %300 = vector.extract_strided_slice %298 {offsets = [0, 0], sizes = [1, 32], strides = [1, 1]} : vector<1x128xf32> to vector<1x32xf32>
    %301 = vector.extract_strided_slice %298 {offsets = [0, 32], sizes = [1, 32], strides = [1, 1]} : vector<1x128xf32> to vector<1x32xf32>
    %302 = vector.extract_strided_slice %299 {offsets = [0, 64], sizes = [1, 32], strides = [1, 1]} : vector<1x128xf32> to vector<1x32xf32>
    %303 = vector.extract_strided_slice %298 {offsets = [0, 96], sizes = [1, 32], strides = [1, 1]} : vector<1x128xf32> to vector<1x32xf32>
    %304 = arith.mulf %301, %222 : vector<1x32xf32>
    %305 = arith.mulf %300, %302 : vector<1x32xf32>
    %306 = arith.addf %304, %305 : vector<1x32xf32>
    %307 = math.tanh %306 : vector<1x32xf32>
    %308 = arith.mulf %303, %307 : vector<1x32xf32>
    %309 = arith.truncf %308 : vector<1x32xf32> to vector<1x32xbf16>
    %cst_66 = arith.constant dense<0.000000e+00> : vector<1x128xf32>
    %310 = tpu.matmul %309, %11, %cst_66 {dimension_numbers = #tpu.dot_dimension_numbers<[1], [0], [0], [1], [0, 0, 1, 1], [], []>} : vector<1x32xbf16>, vector<32x128xbf16>, vector<1x128xf32> -> vector<1x128xf32>
    %311 = arith.addf %310, %14 : vector<1x128xf32>
    %cst_67 = arith.constant 2.000000e-01 : f32
    %312 = vector.broadcast %cst_67 : f32 to vector<1x128xf32>
    %313 = arith.mulf %311, %312 : vector<1x128xf32>
    %314 = math.tanh %313 : vector<1x128xf32>
    %cst_68 = arith.constant 2.500000e+00 : f32
    %315 = vector.broadcast %cst_68 : f32 to vector<1x128xf32>
    %316 = arith.mulf %315, %314 : vector<1x128xf32>
    %c167 = arith.constant 167 : index
    %c0_69 = arith.constant 0 : index
    %317 = vector.load %arg0[%c167, %c0_69] : memref<176x128xf32, #tpu.memory_space<vmem>>, vector<1x128xf32>
    %318 = arith.addf %316, %317 : vector<1x128xf32>
    %cst_70 = arith.constant dense<0xFF800000> : vector<1xf32>
    %319 = vector.multi_reduction <maximumf>, %318, %cst_70 [1] : vector<1x128xf32> to vector<1xf32>
    %320 = vector.shape_cast %319 : vector<1xf32> to vector<1x1xf32>
    %321 = vector.broadcast %320 : vector<1x1xf32> to vector<1x128xf32>
    %322 = arith.cmpf oeq, %318, %321 : vector<1x128xf32>
    %c128_i32_71 = arith.constant 128 : i32
    %323 = vector.broadcast %c128_i32_71 : i32 to vector<1x128xi32>
    %324 = arith.select %322, %0, %323 : vector<1x128xi1>, vector<1x128xi32>
    %cst_72 = arith.constant dense<2147483647> : vector<1xi32>
    %325 = vector.multi_reduction <minsi>, %324, %cst_72 [1] : vector<1x128xi32> to vector<1xi32>
    %326 = vector.shape_cast %325 : vector<1xi32> to vector<1x1xi32>
    %327 = vector.extract %326[0, 0] : i32 from vector<1x1xi32>
    %c3 = arith.constant 3 : index
    %328 = memref.load %arg4[%c3] : memref<6xi32, #tpu.memory_space<smem>>
    memref.store %327, %arg4[%c3] : memref<6xi32, #tpu.memory_space<smem>>
    %329 = arith.addf %316, %5 : vector<1x128xf32>
    %cst_73 = arith.constant dense<0xFF800000> : vector<1xf32>
    %330 = vector.multi_reduction <maximumf>, %329, %cst_73 [1] : vector<1x128xf32> to vector<1xf32>
    %331 = vector.shape_cast %330 : vector<1xf32> to vector<1x1xf32>
    %332 = vector.broadcast %331 : vector<1x1xf32> to vector<1x128xf32>
    %333 = arith.subf %329, %332 : vector<1x128xf32>
    %334 = math.exp %333 : vector<1x128xf32>
    %cst_74 = arith.constant dense<0.000000e+00> : vector<1xf32>
    %335 = vector.multi_reduction <add>, %334, %cst_74 [1] : vector<1x128xf32> to vector<1xf32>
    %336 = vector.shape_cast %335 : vector<1xf32> to vector<1x1xf32>
    %337 = math.log %336 : vector<1x1xf32>
    %338 = tpu.reciprocal %336 {approx = true} : vector<1x1xf32> -> vector<1x1xf32>
    %339 = vector.broadcast %326 : vector<1x1xi32> to vector<1x128xi32>
    %340 = arith.cmpi eq, %0, %339 : vector<1x128xi32>
    %cst_75 = arith.constant 0.000000e+00 : f32
    %341 = vector.broadcast %cst_75 : f32 to vector<1x128xf32>
    %342 = arith.select %340, %333, %341 : vector<1x128xi1>, vector<1x128xf32>
    %cst_76 = arith.constant dense<0.000000e+00> : vector<1xf32>
    %343 = vector.multi_reduction <add>, %342, %cst_76 [1] : vector<1x128xf32> to vector<1xf32>
    %344 = vector.shape_cast %343 : vector<1xf32> to vector<1x1xf32>
    %345 = arith.addf %262, %344 : vector<1x1xf32>
    %346 = arith.subf %345, %337 : vector<1x1xf32>
    %347 = arith.addf %268, %337 : vector<1x1xf32>
    %348 = arith.mulf %334, %333 : vector<1x128xf32>
    %cst_77 = arith.constant dense<0.000000e+00> : vector<1xf32>
    %349 = vector.multi_reduction <add>, %348, %cst_77 [1] : vector<1x128xf32> to vector<1xf32>
    %350 = vector.shape_cast %349 : vector<1xf32> to vector<1x1xf32>
    %351 = arith.mulf %350, %338 : vector<1x1xf32>
    %352 = arith.subf %347, %351 : vector<1x1xf32>
    %353 = arith.index_cast %327 : i32 to index
    %c0_78 = arith.constant 0 : index
    %354 = vector.load %arg1[%353, %c0_78] : memref<8x32xf32, #tpu.memory_space<vmem>>, vector<1x32xf32>
    %355 = tpu.concatenate %354, %289 in 1 : vector<1x32xf32>, vector<1x32xf32> -> vector<1x64xf32>
    %356 = arith.truncf %355 : vector<1x64xf32> to vector<1x64xbf16>
    %cst_79 = arith.constant dense<0.000000e+00> : vector<1x128xf32>
    %357 = tpu.matmul %356, %7, %cst_79 {dimension_numbers = #tpu.dot_dimension_numbers<[1], [0], [0], [1], [0, 0, 1, 1], [], []>} : vector<1x64xbf16>, vector<64x128xbf16>, vector<1x128xf32> -> vector<1x128xf32>
    %358 = arith.addf %357, %12 : vector<1x128xf32>
    %359 = arith.negf %358 : vector<1x128xf32>
    %360 = math.exp %359 : vector<1x128xf32>
    %cst_80 = arith.constant 1.000000e+00 : f32
    %361 = vector.broadcast %cst_80 : f32 to vector<1x128xf32>
    %362 = arith.addf %361, %360 : vector<1x128xf32>
    %363 = arith.divf %361, %362 : vector<1x128xf32>
    %364 = math.tanh %358 : vector<1x128xf32>
    %365 = vector.extract_strided_slice %363 {offsets = [0, 0], sizes = [1, 32], strides = [1, 1]} : vector<1x128xf32> to vector<1x32xf32>
    %366 = vector.extract_strided_slice %363 {offsets = [0, 32], sizes = [1, 32], strides = [1, 1]} : vector<1x128xf32> to vector<1x32xf32>
    %367 = vector.extract_strided_slice %364 {offsets = [0, 64], sizes = [1, 32], strides = [1, 1]} : vector<1x128xf32> to vector<1x32xf32>
    %368 = vector.extract_strided_slice %363 {offsets = [0, 96], sizes = [1, 32], strides = [1, 1]} : vector<1x128xf32> to vector<1x32xf32>
    %369 = arith.mulf %366, %287 : vector<1x32xf32>
    %370 = arith.mulf %365, %367 : vector<1x32xf32>
    %371 = arith.addf %369, %370 : vector<1x32xf32>
    %372 = math.tanh %371 : vector<1x32xf32>
    %373 = arith.mulf %368, %372 : vector<1x32xf32>
    %374 = tpu.concatenate %373, %308 in 1 : vector<1x32xf32>, vector<1x32xf32> -> vector<1x64xf32>
    %375 = arith.truncf %374 : vector<1x64xf32> to vector<1x64xbf16>
    %cst_81 = arith.constant dense<0.000000e+00> : vector<1x128xf32>
    %376 = tpu.matmul %375, %9, %cst_81 {dimension_numbers = #tpu.dot_dimension_numbers<[1], [0], [0], [1], [0, 0, 1, 1], [], []>} : vector<1x64xbf16>, vector<64x128xbf16>, vector<1x128xf32> -> vector<1x128xf32>
    %377 = arith.addf %376, %13 : vector<1x128xf32>
    %378 = arith.negf %377 : vector<1x128xf32>
    %379 = math.exp %378 : vector<1x128xf32>
    %cst_82 = arith.constant 1.000000e+00 : f32
    %380 = vector.broadcast %cst_82 : f32 to vector<1x128xf32>
    %381 = arith.addf %380, %379 : vector<1x128xf32>
    %382 = arith.divf %380, %381 : vector<1x128xf32>
    %383 = math.tanh %377 : vector<1x128xf32>
    %384 = vector.extract_strided_slice %382 {offsets = [0, 0], sizes = [1, 32], strides = [1, 1]} : vector<1x128xf32> to vector<1x32xf32>
    %385 = vector.extract_strided_slice %382 {offsets = [0, 32], sizes = [1, 32], strides = [1, 1]} : vector<1x128xf32> to vector<1x32xf32>
    %386 = vector.extract_strided_slice %383 {offsets = [0, 64], sizes = [1, 32], strides = [1, 1]} : vector<1x128xf32> to vector<1x32xf32>
    %387 = vector.extract_strided_slice %382 {offsets = [0, 96], sizes = [1, 32], strides = [1, 1]} : vector<1x128xf32> to vector<1x32xf32>
    %388 = arith.mulf %385, %306 : vector<1x32xf32>
    %389 = arith.mulf %384, %386 : vector<1x32xf32>
    %390 = arith.addf %388, %389 : vector<1x32xf32>
    %391 = math.tanh %390 : vector<1x32xf32>
    %392 = arith.mulf %387, %391 : vector<1x32xf32>
    %393 = arith.truncf %392 : vector<1x32xf32> to vector<1x32xbf16>
    %cst_83 = arith.constant dense<0.000000e+00> : vector<1x128xf32>
    %394 = tpu.matmul %393, %11, %cst_83 {dimension_numbers = #tpu.dot_dimension_numbers<[1], [0], [0], [1], [0, 0, 1, 1], [], []>} : vector<1x32xbf16>, vector<32x128xbf16>, vector<1x128xf32> -> vector<1x128xf32>
    %395 = arith.addf %394, %14 : vector<1x128xf32>
    %cst_84 = arith.constant 2.000000e-01 : f32
    %396 = vector.broadcast %cst_84 : f32 to vector<1x128xf32>
    %397 = arith.mulf %395, %396 : vector<1x128xf32>
    %398 = math.tanh %397 : vector<1x128xf32>
    %cst_85 = arith.constant 2.500000e+00 : f32
    %399 = vector.broadcast %cst_85 : f32 to vector<1x128xf32>
    %400 = arith.mulf %399, %398 : vector<1x128xf32>
    %c168 = arith.constant 168 : index
    %c0_86 = arith.constant 0 : index
    %401 = vector.load %arg0[%c168, %c0_86] : memref<176x128xf32, #tpu.memory_space<vmem>>, vector<1x128xf32>
    %402 = arith.addf %400, %401 : vector<1x128xf32>
    %cst_87 = arith.constant dense<0xFF800000> : vector<1xf32>
    %403 = vector.multi_reduction <maximumf>, %402, %cst_87 [1] : vector<1x128xf32> to vector<1xf32>
    %404 = vector.shape_cast %403 : vector<1xf32> to vector<1x1xf32>
    %405 = vector.broadcast %404 : vector<1x1xf32> to vector<1x128xf32>
    %406 = arith.cmpf oeq, %402, %405 : vector<1x128xf32>
    %c128_i32_88 = arith.constant 128 : i32
    %407 = vector.broadcast %c128_i32_88 : i32 to vector<1x128xi32>
    %408 = arith.select %406, %0, %407 : vector<1x128xi1>, vector<1x128xi32>
    %cst_89 = arith.constant dense<2147483647> : vector<1xi32>
    %409 = vector.multi_reduction <minsi>, %408, %cst_89 [1] : vector<1x128xi32> to vector<1xi32>
    %410 = vector.shape_cast %409 : vector<1xi32> to vector<1x1xi32>
    %411 = vector.extract %410[0, 0] : i32 from vector<1x1xi32>
    %c4 = arith.constant 4 : index
    %412 = memref.load %arg4[%c4] : memref<6xi32, #tpu.memory_space<smem>>
    memref.store %411, %arg4[%c4] : memref<6xi32, #tpu.memory_space<smem>>
    %413 = arith.addf %400, %5 : vector<1x128xf32>
    %cst_90 = arith.constant dense<0xFF800000> : vector<1xf32>
    %414 = vector.multi_reduction <maximumf>, %413, %cst_90 [1] : vector<1x128xf32> to vector<1xf32>
    %415 = vector.shape_cast %414 : vector<1xf32> to vector<1x1xf32>
    %416 = vector.broadcast %415 : vector<1x1xf32> to vector<1x128xf32>
    %417 = arith.subf %413, %416 : vector<1x128xf32>
    %418 = math.exp %417 : vector<1x128xf32>
    %cst_91 = arith.constant dense<0.000000e+00> : vector<1xf32>
    %419 = vector.multi_reduction <add>, %418, %cst_91 [1] : vector<1x128xf32> to vector<1xf32>
    %420 = vector.shape_cast %419 : vector<1xf32> to vector<1x1xf32>
    %421 = math.log %420 : vector<1x1xf32>
    %422 = tpu.reciprocal %420 {approx = true} : vector<1x1xf32> -> vector<1x1xf32>
    %423 = vector.broadcast %410 : vector<1x1xi32> to vector<1x128xi32>
    %424 = arith.cmpi eq, %0, %423 : vector<1x128xi32>
    %cst_92 = arith.constant 0.000000e+00 : f32
    %425 = vector.broadcast %cst_92 : f32 to vector<1x128xf32>
    %426 = arith.select %424, %417, %425 : vector<1x128xi1>, vector<1x128xf32>
    %cst_93 = arith.constant dense<0.000000e+00> : vector<1xf32>
    %427 = vector.multi_reduction <add>, %426, %cst_93 [1] : vector<1x128xf32> to vector<1xf32>
    %428 = vector.shape_cast %427 : vector<1xf32> to vector<1x1xf32>
    %429 = arith.addf %346, %428 : vector<1x1xf32>
    %430 = arith.subf %429, %421 : vector<1x1xf32>
    %431 = arith.addf %352, %421 : vector<1x1xf32>
    %432 = arith.mulf %418, %417 : vector<1x128xf32>
    %cst_94 = arith.constant dense<0.000000e+00> : vector<1xf32>
    %433 = vector.multi_reduction <add>, %432, %cst_94 [1] : vector<1x128xf32> to vector<1xf32>
    %434 = vector.shape_cast %433 : vector<1xf32> to vector<1x1xf32>
    %435 = arith.mulf %434, %422 : vector<1x1xf32>
    %436 = arith.subf %431, %435 : vector<1x1xf32>
    %437 = arith.index_cast %411 : i32 to index
    %c0_95 = arith.constant 0 : index
    %438 = vector.load %arg1[%437, %c0_95] : memref<8x32xf32, #tpu.memory_space<vmem>>, vector<1x32xf32>
    %439 = tpu.concatenate %438, %373 in 1 : vector<1x32xf32>, vector<1x32xf32> -> vector<1x64xf32>
    %440 = arith.truncf %439 : vector<1x64xf32> to vector<1x64xbf16>
    %cst_96 = arith.constant dense<0.000000e+00> : vector<1x128xf32>
    %441 = tpu.matmul %440, %7, %cst_96 {dimension_numbers = #tpu.dot_dimension_numbers<[1], [0], [0], [1], [0, 0, 1, 1], [], []>} : vector<1x64xbf16>, vector<64x128xbf16>, vector<1x128xf32> -> vector<1x128xf32>
    %442 = arith.addf %441, %12 : vector<1x128xf32>
    %443 = arith.negf %442 : vector<1x128xf32>
    %444 = math.exp %443 : vector<1x128xf32>
    %cst_97 = arith.constant 1.000000e+00 : f32
    %445 = vector.broadcast %cst_97 : f32 to vector<1x128xf32>
    %446 = arith.addf %445, %444 : vector<1x128xf32>
    %447 = arith.divf %445, %446 : vector<1x128xf32>
    %448 = math.tanh %442 : vector<1x128xf32>
    %449 = vector.extract_strided_slice %447 {offsets = [0, 0], sizes = [1, 32], strides = [1, 1]} : vector<1x128xf32> to vector<1x32xf32>
    %450 = vector.extract_strided_slice %447 {offsets = [0, 32], sizes = [1, 32], strides = [1, 1]} : vector<1x128xf32> to vector<1x32xf32>
    %451 = vector.extract_strided_slice %448 {offsets = [0, 64], sizes = [1, 32], strides = [1, 1]} : vector<1x128xf32> to vector<1x32xf32>
    %452 = vector.extract_strided_slice %447 {offsets = [0, 96], sizes = [1, 32], strides = [1, 1]} : vector<1x128xf32> to vector<1x32xf32>
    %453 = arith.mulf %450, %371 : vector<1x32xf32>
    %454 = arith.mulf %449, %451 : vector<1x32xf32>
    %455 = arith.addf %453, %454 : vector<1x32xf32>
    %456 = math.tanh %455 : vector<1x32xf32>
    %457 = arith.mulf %452, %456 : vector<1x32xf32>
    %458 = tpu.concatenate %457, %392 in 1 : vector<1x32xf32>, vector<1x32xf32> -> vector<1x64xf32>
    %459 = arith.truncf %458 : vector<1x64xf32> to vector<1x64xbf16>
    %cst_98 = arith.constant dense<0.000000e+00> : vector<1x128xf32>
    %460 = tpu.matmul %459, %9, %cst_98 {dimension_numbers = #tpu.dot_dimension_numbers<[1], [0], [0], [1], [0, 0, 1, 1], [], []>} : vector<1x64xbf16>, vector<64x128xbf16>, vector<1x128xf32> -> vector<1x128xf32>
    %461 = arith.addf %460, %13 : vector<1x128xf32>
    %462 = arith.negf %461 : vector<1x128xf32>
    %463 = math.exp %462 : vector<1x128xf32>
    %cst_99 = arith.constant 1.000000e+00 : f32
    %464 = vector.broadcast %cst_99 : f32 to vector<1x128xf32>
    %465 = arith.addf %464, %463 : vector<1x128xf32>
    %466 = arith.divf %464, %465 : vector<1x128xf32>
    %467 = math.tanh %461 : vector<1x128xf32>
    %468 = vector.extract_strided_slice %466 {offsets = [0, 0], sizes = [1, 32], strides = [1, 1]} : vector<1x128xf32> to vector<1x32xf32>
    %469 = vector.extract_strided_slice %466 {offsets = [0, 32], sizes = [1, 32], strides = [1, 1]} : vector<1x128xf32> to vector<1x32xf32>
    %470 = vector.extract_strided_slice %467 {offsets = [0, 64], sizes = [1, 32], strides = [1, 1]} : vector<1x128xf32> to vector<1x32xf32>
    %471 = vector.extract_strided_slice %466 {offsets = [0, 96], sizes = [1, 32], strides = [1, 1]} : vector<1x128xf32> to vector<1x32xf32>
    %472 = arith.mulf %469, %390 : vector<1x32xf32>
    %473 = arith.mulf %468, %470 : vector<1x32xf32>
    %474 = arith.addf %472, %473 : vector<1x32xf32>
    %475 = math.tanh %474 : vector<1x32xf32>
    %476 = arith.mulf %471, %475 : vector<1x32xf32>
    %477 = arith.truncf %476 : vector<1x32xf32> to vector<1x32xbf16>
    %cst_100 = arith.constant dense<0.000000e+00> : vector<1x128xf32>
    %478 = tpu.matmul %477, %11, %cst_100 {dimension_numbers = #tpu.dot_dimension_numbers<[1], [0], [0], [1], [0, 0, 1, 1], [], []>} : vector<1x32xbf16>, vector<32x128xbf16>, vector<1x128xf32> -> vector<1x128xf32>
    %479 = arith.addf %478, %14 : vector<1x128xf32>
    %cst_101 = arith.constant 2.000000e-01 : f32
    %480 = vector.broadcast %cst_101 : f32 to vector<1x128xf32>
    %481 = arith.mulf %479, %480 : vector<1x128xf32>
    %482 = math.tanh %481 : vector<1x128xf32>
    %cst_102 = arith.constant 2.500000e+00 : f32
    %483 = vector.broadcast %cst_102 : f32 to vector<1x128xf32>
    %484 = arith.mulf %483, %482 : vector<1x128xf32>
    %c169 = arith.constant 169 : index
    %c0_103 = arith.constant 0 : index
    %485 = vector.load %arg0[%c169, %c0_103] : memref<176x128xf32, #tpu.memory_space<vmem>>, vector<1x128xf32>
    %486 = arith.addf %484, %485 : vector<1x128xf32>
    %cst_104 = arith.constant dense<0xFF800000> : vector<1xf32>
    %487 = vector.multi_reduction <maximumf>, %486, %cst_104 [1] : vector<1x128xf32> to vector<1xf32>
    %488 = vector.shape_cast %487 : vector<1xf32> to vector<1x1xf32>
    %489 = vector.broadcast %488 : vector<1x1xf32> to vector<1x128xf32>
    %490 = arith.cmpf oeq, %486, %489 : vector<1x128xf32>
    %c128_i32_105 = arith.constant 128 : i32
    %491 = vector.broadcast %c128_i32_105 : i32 to vector<1x128xi32>
    %492 = arith.select %490, %0, %491 : vector<1x128xi1>, vector<1x128xi32>
    %cst_106 = arith.constant dense<2147483647> : vector<1xi32>
    %493 = vector.multi_reduction <minsi>, %492, %cst_106 [1] : vector<1x128xi32> to vector<1xi32>
    %494 = vector.shape_cast %493 : vector<1xi32> to vector<1x1xi32>
    %495 = vector.extract %494[0, 0] : i32 from vector<1x1xi32>
    %c5 = arith.constant 5 : index
    %496 = memref.load %arg4[%c5] : memref<6xi32, #tpu.memory_space<smem>>
    memref.store %495, %arg4[%c5] : memref<6xi32, #tpu.memory_space<smem>>
    %497 = arith.addf %484, %5 : vector<1x128xf32>
    %cst_107 = arith.constant dense<0xFF800000> : vector<1xf32>
    %498 = vector.multi_reduction <maximumf>, %497, %cst_107 [1] : vector<1x128xf32> to vector<1xf32>
    %499 = vector.shape_cast %498 : vector<1xf32> to vector<1x1xf32>
    %500 = vector.broadcast %499 : vector<1x1xf32> to vector<1x128xf32>
    %501 = arith.subf %497, %500 : vector<1x128xf32>
    %502 = math.exp %501 : vector<1x128xf32>
    %cst_108 = arith.constant dense<0.000000e+00> : vector<1xf32>
    %503 = vector.multi_reduction <add>, %502, %cst_108 [1] : vector<1x128xf32> to vector<1xf32>
    %504 = vector.shape_cast %503 : vector<1xf32> to vector<1x1xf32>
    %505 = math.log %504 : vector<1x1xf32>
    %506 = tpu.reciprocal %504 {approx = true} : vector<1x1xf32> -> vector<1x1xf32>
    %507 = vector.broadcast %494 : vector<1x1xi32> to vector<1x128xi32>
    %508 = arith.cmpi eq, %0, %507 : vector<1x128xi32>
    %cst_109 = arith.constant 0.000000e+00 : f32
    %509 = vector.broadcast %cst_109 : f32 to vector<1x128xf32>
    %510 = arith.select %508, %501, %509 : vector<1x128xi1>, vector<1x128xf32>
    %cst_110 = arith.constant dense<0.000000e+00> : vector<1xf32>
    %511 = vector.multi_reduction <add>, %510, %cst_110 [1] : vector<1x128xf32> to vector<1xf32>
    %512 = vector.shape_cast %511 : vector<1xf32> to vector<1x1xf32>
    %513 = arith.addf %430, %512 : vector<1x1xf32>
    %514 = arith.subf %513, %505 : vector<1x1xf32>
    %515 = arith.addf %436, %505 : vector<1x1xf32>
    %516 = arith.mulf %502, %501 : vector<1x128xf32>
    %cst_111 = arith.constant dense<0.000000e+00> : vector<1xf32>
    %517 = vector.multi_reduction <add>, %516, %cst_111 [1] : vector<1x128xf32> to vector<1xf32>
    %518 = vector.shape_cast %517 : vector<1xf32> to vector<1x1xf32>
    %519 = arith.mulf %518, %506 : vector<1x1xf32>
    %520 = arith.subf %515, %519 : vector<1x1xf32>
    %c0_112 = arith.constant 0 : index
    %c0_113 = arith.constant 0 : index
    %521 = vector.load %arg2[%c0_112, %c0_113] : memref<1x1xf32, #tpu.memory_space<vmem>>, vector<1x1xf32>
    tpu.vector_store %arg2[%c0_112, %c0_113], %514 {strides = array<i32>} : memref<1x1xf32, #tpu.memory_space<vmem>>, vector<1x1xf32>,
    %c0_114 = arith.constant 0 : index
    %c0_115 = arith.constant 0 : index
    %522 = vector.load %arg3[%c0_114, %c0_115] : memref<1x1xf32, #tpu.memory_space<vmem>>, vector<1x1xf32>
    tpu.vector_store %arg3[%c0_114, %c0_115], %520 {strides = array<i32>} : memref<1x1xf32, #tpu.memory_space<vmem>>, vector<1x1xf32>,
    return
  }
}

</mosaic_0001>

<llo_original>
// kernel: tpu_custom_call.1
$region0: #{tpu_custom_call.1}
  #allocation0 [shape = 'u32[]', space=smem, size = 0x4, offset = 0x4, fixed_abs, tag = 'smem constant byte address 0x4 - core index']
  #allocation1 [shape = 'u32[144,128]{1,0:T(1,128)}', space=vmem, size = 0x12000, scoped, tag = 'internal scratch']
  %s0 = inlined_call_operand.hbm [shape: f32[176,128], index: 0, kind: input, shape index: {}]
  %s1 = inlined_call_operand.hbm [shape: f32[8,32], index: 1, kind: input, shape index: {}]
  %s2 = inlined_call_operand.hbm [shape: f32[1,1], index: 2, kind: output, shape index: {0}]
  %s3 = inlined_call_operand.hbm [shape: f32[1,1], index: 3, kind: output, shape index: {1}]
  %s4 = inlined_call_operand.hbm [shape: s32[6], index: 4, kind: output, shape index: {2}]
  %5 = xla_tuple %s2, %s3, %s4
  %s6 = sld [smem:[#allocation0]]
  $region42: #{tpu_custom_call.1} parent=0
    _
  %s8 = ssub.s32 1, %s6
  %s9 = scalar_select 0, %s8, %s6
  $region1: #{tpu_custom_call.1} parent=0
    #allocation2 [shape = 'u8[90112]{0}', space=vmem, size = 0x16000, scoped, tag = 'input window, operand 0, single buffered']
    #allocation3 [shape = 's32[1]{0}', space=sflag, size = 0x4, scoped, tag = 'scoped memory for tpu_custom_call.1']
    #allocation4 [shape = 's32[1]{0}', space=sflag, size = 0x4, scoped, tag = 'scoped memory for tpu_custom_call.1']
    #allocation5 [shape = 's32[1]{0}', space=sflag, size = 0x4, scoped, tag = 'scoped memory for tpu_custom_call.1']
    #allocation6 [shape = 'u8[4096]{0}', space=vmem, size = 0x1000, scoped, tag = 'input window, operand 1, single buffered']
    #allocation7 [shape = 's32[1]{0}', space=sflag, size = 0x4, scoped, tag = 'scoped memory for tpu_custom_call.1']
    #allocation8 [shape = 'u8[512]{0}', space=vmem, size = 0x400, scoped, tag = 'output window, operand 0, single buffered']
    #allocation9 [shape = 'u8[512]{0}', space=vmem, size = 0x400, scoped, tag = 'output window, operand 1, single buffered']
    #allocation10 [shape = 's32[1]{0}', space=sflag, size = 0x4, scoped, tag = 'scoped memory for tpu_custom_call.1']
    #allocation11 [shape = 'u8[512]{0}', space=smem, size = 0x200, scoped, tag = 'output window, operand 2, single buffered']
    %10 = vsyncpa [#allocation3], 0
    %11 = vsyncpa [#allocation7], 0
    %12 = vsyncpa [#allocation4], 0
    %13 = vsyncpa [#allocation10], 0
    %14 = vsyncpa [#allocation5], 0
    // Predicated region
    $region2: #{tpu_custom_call.1} parent=1 // pred_check
      _
    $region3: #{tpu_custom_call.1} parent=1 // pred_check_branch
      %16 = sbr.rel (0) target = $region5
    $region4: #{tpu_custom_call.1} parent=1 // pred_region
      %s18 = ssub.s32 2816, 2816
      %19 = vsyncadd [#allocation3], %s18
      %s20 = sshll.u32 [#allocation2], 4
      %s21 = int_to_ptr.vmem [resolvable:$true] %s20
      %26 = dma.hbm_to_vmem [thread:$0]  %s0, 2816, %s21, [#allocation3], 128, 128, 8
    $region5: #{tpu_custom_call.1} parent=1 // pred_fallthru
      _
    // Predicated region
    $region6: #{tpu_custom_call.1} parent=1 // pred_check
      _
    $region7: #{tpu_custom_call.1} parent=1 // pred_check_branch
      %28 = sbr.rel (0) target = $region9
    $region8: #{tpu_custom_call.1} parent=1 // pred_region
      %s30 = ssub.s32 128, 128
      %31 = vsyncadd [#allocation7], %s30
      %s33 = sshll.u32 [#allocation6], 4
      %s34 = int_to_ptr.vmem [resolvable:$true] %s33
      %36 = dma.hbm_to_vmem [thread:$0]  %s1, 128, %s34, [#allocation7]
    $region9: #{tpu_custom_call.1} parent=1 // pred_fallthru
      _
    // Predicated region
    $region10: #{tpu_custom_call.1} parent=1 // pred_check
      _
    $region11: #{tpu_custom_call.1} parent=1 // pred_check_branch
      %38 = sbr.rel (0) target = $region13
    $region12: #{tpu_custom_call.1} parent=1 // pred_region
      %39 = dma.done [#allocation3], 2816
    $region13: #{tpu_custom_call.1} parent=1 // pred_fallthru
      _
    // Predicated region
    $region14: #{tpu_custom_call.1} parent=1 // pred_check
      _
    $region15: #{tpu_custom_call.1} parent=1 // pred_check_branch
      %41 = sbr.rel (0) target = $region17
    $region16: #{tpu_custom_call.1} parent=1 // pred_region
      %42 = dma.done [#allocation7], 128
    $region17: #{tpu_custom_call.1} parent=1 // pred_fallthru
      _
    %v44 = vlaneseq
    %v45 = vand.u32 %v44, 127
    %vm46 = vcmp.lt.s32.totalorder %v45, 5
    %v47 = vsel %vm46, 0.0, -1e+30
    %v48 = vld [vmem:[#allocation2] sm:$0xff]
    %v49 = vld [vmem:[#allocation2 + $0x8] sm:$0xff]
    %v50 = vld [vmem:[#allocation2 + $0x10] sm:$0xff]
    %v51 = vld [vmem:[#allocation2 + $0x18] sm:$0xff]
    %v52 = vld [vmem:[#allocation2 + $0x20] sm:$0xff]
    %v53 = vld [vmem:[#allocation2 + $0x28] sm:$0xff]
    %v54 = vld [vmem:[#allocation2 + $0x30] sm:$0xff]
    %v55 = vld [vmem:[#allocation2 + $0x38] sm:$0xff]
    %v56 = vpack.c.bf16 %v49, %v48
    %v57 = vpack.c.bf16 %v51, %v50
    %v58 = vpack.c.bf16 %v53, %v52
    %v59 = vpack.c.bf16 %v55, %v54
    %v60 = vld [vmem:[#allocation2 + $0x40] sm:$0xff]
    %v61 = vld [vmem:[#allocation2 + $0x48] sm:$0xff]
    %v62 = vld [vmem:[#allocation2 + $0x50] sm:$0xff]
    %v63 = vld [vmem:[#allocation2 + $0x58] sm:$0xff]
    %v64 = vld [vmem:[#allocation2 + $0x60] sm:$0xff]
    %v65 = vld [vmem:[#allocation2 + $0x68] sm:$0xff]
    %v66 = vld [vmem:[#allocation2 + $0x70] sm:$0xff]
    %v67 = vld [vmem:[#allocation2 + $0x78] sm:$0xff]
    %v68 = vpack.c.bf16 %v61, %v60
    %v69 = vpack.c.bf16 %v63, %v62
    %v70 = vpack.c.bf16 %v65, %v64
    %v71 = vpack.c.bf16 %v67, %v66
    %v72 = vld [vmem:[#allocation2 + $0x80] sm:$0xff]
    %v73 = vld [vmem:[#allocation2 + $0x88] sm:$0xff]
    %v74 = vld [vmem:[#allocation2 + $0x90] sm:$0xff]
    %v75 = vld [vmem:[#allocation2 + $0x98] sm:$0xff]
    %v76 = vpack.c.bf16 %v73, %v72
    %v77 = vpack.c.bf16 %v75, %v74
    %v78 = vld [vmem:[#allocation2 + $0xa0] sm:$0x1]
    %v79 = vld [vmem:[#allocation2 + $0xa1] sm:$0x1]
    %v80 = vld [vmem:[#allocation2 + $0xa2] sm:$0x1]
    %v81 = vld [vmem:[#allocation2 + $0xa3] sm:$0x1]
    %vm82 = vcmask 261120
    %v83 = vsel %vm82, %v81, 0.0
    %v84 = vpack.c.bf16 %v83, %v83
    %vm85 = vcmask 523264
    %v87 = vsel %vm85, %v84, 0
    %89 = vmatprep.subr.bf16.mxu0 0
    %90 = vmatpush1.bf16.msra.mxu0 0
    %91 = vmatprep.subr.bf16.mxu0 0
    %92 = vmatpush1.bf16.msra.mxu0 0
    %93 = vmatprep.subr.bf16.mxu0 0
    %94 = vmatpush1.bf16.msra.mxu0 0
    %95 = vmatprep.subr.bf16.mxu0 0
    %96 = vmatpush1.bf16.msra.mxu0 0
    %97 = vmatprep.subr.bf16.mxu0 0
    %98 = vmatpush1.bf16.msra.mxu0 %v59
    %99 = vmatprep.subr.bf16.mxu0 0
    %100 = vmatpush1.bf16.msra.mxu0 %v58
    %101 = vmatprep.subr.bf16.mxu0 0
    %102 = vmatpush1.bf16.msra.mxu0 %v57
    %103 = vmatprep.subr.bf16.mxu0 0
    %104 = vmatpush1.bf16.msra.mxu0 %v56
    %105 = vmatprep.subr.bf16.mxu0 0
    %106 = vmatpush2.bf16.msra.mxu0 0
    %107 = vmatprep.subr.bf16.mxu0 0
    %108 = vmatpush2.bf16.msra.mxu0 0
    %109 = vmatprep.subr.bf16.mxu0 0
    %110 = vmatpush2.bf16.msra.mxu0 0
    %111 = vmatprep.subr.bf16.mxu0 0
    %112 = vmatpush2.bf16.msra.mxu0 0
    %113 = vmatprep.subr.bf16.mxu0 0
    %114 = vmatpush2.bf16.msra.mxu0 0
    %115 = vmatprep.subr.bf16.mxu0 0
    %116 = vmatpush2.bf16.msra.mxu0 0
    %117 = vmatprep.subr.bf16.mxu0 0
    %118 = vmatpush2.bf16.msra.mxu0 0
    %119 = vmatprep.subr.bf16.mxu0 0
    %120 = vmatpush2.bf16.msra.mxu0 0
    %121 = vmatprep.mubr.bf16.mxu0 0
    %122 = vmatmul.mubr.bf16.gmra.mxu0 %v87
    %v123 = vpop.f32.mrf.mxu0
    %v124 = vadd.f32 %v78, %v123
    %v125 = vpop.f32.mrf.mxu0
    %v126 = vpop.f32.mrf.mxu0
    %v127 = vpop.f32.mrf.mxu0
    %128 = vdwg.mxu0
    %v129 = vxor.u32 %v124, 2147483648
    %v130 = vmul.f32 %v129, 1.442695
    %v131 = vpow.pop %v130
    %v132 = vadd.f32 %v131, 1.0
    %v133 = vrcp.pop %v132
    %v134 = vmul.f32 1.0, %v133
    %v135 = vtanh.pop %v124
    %v136 = vmul.f32 %v134, 0.0
    %138 = vrot.lane.b32.xlu0 %v135, 64
    %v139 = vpop.permute.xlu0 %138
    %v141 = vmul.f32 %v134, %v139
    %143 = vrot.lane.b32.xlu0 %v141, 32
    %v144 = vpop.permute.xlu0 %143
    %v146 = vadd.f32 %v136, %v144
    %v147 = vtanh.pop %v146
    %149 = vrot.lane.b32.xlu0 %v147, 64
    %v150 = vpop.permute.xlu0 %149
    %v152 = vmul.f32 %v134, %v150
    %154 = vrot.lane.b32.xlu0 %v152, 32
    %v155 = vpop.permute.xlu0 %154
    %v157 = vsel %vm82, %v155, 0.0
    %v158 = vpack.c.bf16 %v157, %v157
    %v160 = vsel %vm85, %v158, 0
    %162 = vmatprep.subr.bf16.mxu0 0
    %163 = vmatpush1.bf16.msra.mxu0 0
    %164 = vmatprep.subr.bf16.mxu0 0
    %165 = vmatpush1.bf16.msra.mxu0 0
    %166 = vmatprep.subr.bf16.mxu0 0
    %167 = vmatpush1.bf16.msra.mxu0 0
    %168 = vmatprep.subr.bf16.mxu0 0
    %169 = vmatpush1.bf16.msra.mxu0 0
    %170 = vmatprep.subr.bf16.mxu0 0
    %171 = vmatpush1.bf16.msra.mxu0 %v71
    %172 = vmatprep.subr.bf16.mxu0 0
    %173 = vmatpush1.bf16.msra.mxu0 %v70
    %174 = vmatprep.subr.bf16.mxu0 0
    %175 = vmatpush1.bf16.msra.mxu0 %v69
    %176 = vmatprep.subr.bf16.mxu0 0
    %177 = vmatpush1.bf16.msra.mxu0 %v68
    %178 = vmatprep.subr.bf16.mxu0 0
    %179 = vmatpush2.bf16.msra.mxu0 0
    %180 = vmatprep.subr.bf16.mxu0 0
    %181 = vmatpush2.bf16.msra.mxu0 0
    %182 = vmatprep.subr.bf16.mxu0 0
    %183 = vmatpush2.bf16.msra.mxu0 0
    %184 = vmatprep.subr.bf16.mxu0 0
    %185 = vmatpush2.bf16.msra.mxu0 0
    %186 = vmatprep.subr.bf16.mxu0 0
    %187 = vmatpush2.bf16.msra.mxu0 0
    %188 = vmatprep.subr.bf16.mxu0 0
    %189 = vmatpush2.bf16.msra.mxu0 0
    %190 = vmatprep.subr.bf16.mxu0 0
    %191 = vmatpush2.bf16.msra.mxu0 0
    %192 = vmatprep.subr.bf16.mxu0 0
    %193 = vmatpush2.bf16.msra.mxu0 0
    %194 = vmatprep.mubr.bf16.mxu0 0
    %195 = vmatmul.mubr.bf16.gmra.mxu0 %v160
    %v196 = vpop.f32.mrf.mxu0
    %v197 = vadd.f32 %v79, %v196
    %v198 = vpop.f32.mrf.mxu0
    %v199 = vpop.f32.mrf.mxu0
    %v200 = vpop.f32.mrf.mxu0
    %201 = vdwg.mxu0
    %v202 = vxor.u32 %v197, 2147483648
    %v203 = vmul.f32 %v202, 1.442695
    %v204 = vpow.pop %v203
    %v205 = vadd.f32 %v204, 1.0
    %v206 = vrcp.pop %v205
    %v207 = vmul.f32 1.0, %v206
    %v208 = vtanh.pop %v197
    %v209 = vmul.f32 %v207, 0.0
    %211 = vrot.lane.b32.xlu0 %v208, 64
    %v212 = vpop.permute.xlu0 %211
    %v214 = vmul.f32 %v207, %v212
    %216 = vrot.lane.b32.xlu0 %v214, 32
    %v217 = vpop.permute.xlu0 %216
    %v219 = vadd.f32 %v209, %v217
    %v220 = vtanh.pop %v219
    %222 = vrot.lane.b32.xlu0 %v220, 64
    %v223 = vpop.permute.xlu0 %222
    %v225 = vmul.f32 %v207, %v223
    %v226 = vpack.c.bf16 %v225, %v225
    %228 = vrot.lane.b32.xlu0 %v226, 32
    %v229 = vpop.permute.xlu0 %228
    %v231 = vsel %vm82, %v229, 0
    %233 = vmatprep.subr.bf16.mxu0 0
    %234 = vmatpush1.bf16.msra.mxu0 0
    %235 = vmatprep.subr.bf16.mxu0 0
    %236 = vmatpush1.bf16.msra.mxu0 0
    %237 = vmatprep.subr.bf16.mxu0 0
    %238 = vmatpush1.bf16.msra.mxu0 0
    %239 = vmatprep.subr.bf16.mxu0 0
    %240 = vmatpush1.bf16.msra.mxu0 0
    %241 = vmatprep.subr.bf16.mxu0 0
    %242 = vmatpush1.bf16.msra.mxu0 0
    %243 = vmatprep.subr.bf16.mxu0 0
    %244 = vmatpush1.bf16.msra.mxu0 0
    %245 = vmatprep.subr.bf16.mxu0 0
    %246 = vmatpush1.bf16.msra.mxu0 %v77
    %247 = vmatprep.subr.bf16.mxu0 0
    %248 = vmatpush1.bf16.msra.mxu0 %v76
    %249 = vmatprep.subr.bf16.mxu0 0
    %250 = vmatpush2.bf16.msra.mxu0 0
    %251 = vmatprep.subr.bf16.mxu0 0
    %252 = vmatpush2.bf16.msra.mxu0 0
    %253 = vmatprep.subr.bf16.mxu0 0
    %254 = vmatpush2.bf16.msra.mxu0 0
    %255 = vmatprep.subr.bf16.mxu0 0
    %256 = vmatpush2.bf16.msra.mxu0 0
    %257 = vmatprep.subr.bf16.mxu0 0
    %258 = vmatpush2.bf16.msra.mxu0 0
    %259 = vmatprep.subr.bf16.mxu0 0
    %260 = vmatpush2.bf16.msra.mxu0 0
    %261 = vmatprep.subr.bf16.mxu0 0
    %262 = vmatpush2.bf16.msra.mxu0 0
    %263 = vmatprep.subr.bf16.mxu0 0
    %264 = vmatpush2.bf16.msra.mxu0 0
    %265 = vmatprep.mubr.bf16.mxu0 0
    %266 = vmatmul.mubr.bf16.gmra.mxu0 %v231
    %v267 = vpop.f32.mrf.mxu0
    %v268 = vadd.f32 %v80, %v267
    %v269 = vpop.f32.mrf.mxu0
    %v270 = vpop.f32.mrf.mxu0
    %v271 = vpop.f32.mrf.mxu0
    %272 = vdwg.mxu0
    %v273 = vmul.f32 %v268, 0.2
    %v274 = vtanh.pop %v273
    %v275 = vmul.f32 %v274, 2.5
    %v276 = vld [vmem:[#allocation2 + $0xa4] sm:$0x1]
    %v277 = vadd.f32 %v275, %v276
    %vm278 = vcmask 1040384
    %v279 = vsel %vm278, %v277, -inf
    %280 = vmax.xlane.f32.xlu0 %v279
    %v281 = vpop.xlane.xlu0 %280
    %vm282 = vcmp.eq.f32.partialorder %v277, %v281
    %v283 = vsel %vm282, %v45, 128
    %v284 = vsel %vm278, %v283, 2147483647
    %v285 = vand.u32 %v284, 65535
    %v286 = vshra.s32 %v284, 16
    %v287 = vcvt.s32.f32 %v285
    %v288 = vcvt.s32.f32 %v286
    %289 = vmin.xlane.f32.xlu0 %v288
    %v290 = vpop.xlane.xlu0 %289
    %vm291 = vcmp.eq.f32.partialorder %v288, %v290
    %v292 = vsel %vm291, %v287, inf
    %293 = vmin.xlane.f32.xlu0 %v292
    %v294 = vpop.xlane.xlu0 %293
    %v295 = vcvt.f32.s32 %v294
    %v296 = vcvt.f32.s32 %v290
    %v297 = vshll.u32 %v296, 16
    %v298 = vadd.s32 %v297, %v295
    %s299 = vtos %v298
    %s300 = scalar_lea.smem [#allocation11], 0
    %301 = sst [smem:[%s300]] %s299
    %v302 = vadd.f32 %v275, %v47
    %v303 = vsel %vm278, %v302, -inf
    %304 = vmax.xlane.f32.xlu0 %v303
    %v305 = vpop.xlane.xlu0 %304
    %v306 = vsub.f32 %v302, %v305
    %v307 = vmul.f32 %v306, 1.442695
    %v308 = vpow.pop %v307
    %v309 = vsel %vm278, %v308, 0.0
    %310 = vadd.xlane.f32.xlu0 %v309
    %v311 = vpop.xlane.xlu0 %310
    %v312 = vlog2.pop %v311
    %v313 = vmul.f32 %v312, 0.6931472
    %v314 = vrcp.pop %v311
    %vm315 = vcmp.eq.s32.totalorder %v45, %v298
    %v316 = vsel %vm315, %v306, 0.0
    %v317 = vsel %vm278, %v316, 0.0
    %318 = vadd.xlane.f32.xlu0 %v317
    %v319 = vpop.xlane.xlu0 %318
    %v320 = vadd.f32 %v319, 0.0
    %v321 = vsub.f32 %v320, %v313
    %v322 = vadd.f32 %v313, 0.0
    %v323 = vmul.f32 %v308, %v306
    %v324 = vsel %vm278, %v323, 0.0
    %325 = vadd.xlane.f32.xlu0 %v324
    %v326 = vpop.xlane.xlu0 %325
    %v327 = vmul.f32 %v326, %v314
    %v328 = vsub.f32 %v322, %v327
    %s329 = scalar_lea.vmem [#allocation6], %s299
    %v330 = vld [vmem:[%s329] sm:$0x1]
    %331 = vrot.lane.b32.xlu0 %v152, 64
    %v332 = vpop.permute.xlu0 %331
    %v334 = vsel %vm82, %v330, %v332
    %v335 = vpack.c.bf16 %v334, %v334
    %v337 = vsel %vm85, %v335, 0
    %339 = vmatprep.subr.bf16.mxu0 0
    %340 = vmatpush1.bf16.msra.mxu0 0
    %341 = vmatprep.subr.bf16.mxu0 0
    %342 = vmatpush1.bf16.msra.mxu0 0
    %343 = vmatprep.subr.bf16.mxu0 0
    %344 = vmatpush1.bf16.msra.mxu0 0
    %345 = vmatprep.subr.bf16.mxu0 0
    %346 = vmatpush1.bf16.msra.mxu0 0
    %347 = vmatprep.subr.bf16.mxu0 0
    %348 = vmatpush1.bf16.msra.mxu0 %v59
    %349 = vmatprep.subr.bf16.mxu0 0
    %350 = vmatpush1.bf16.msra.mxu0 %v58
    %351 = vmatprep.subr.bf16.mxu0 0
    %352 = vmatpush1.bf16.msra.mxu0 %v57
    %353 = vmatprep.subr.bf16.mxu0 0
    %354 = vmatpush1.bf16.msra.mxu0 %v56
    %355 = vmatprep.subr.bf16.mxu0 0
    %356 = vmatpush2.bf16.msra.mxu0 0
    %357 = vmatprep.subr.bf16.mxu0 0
    %358 = vmatpush2.bf16.msra.mxu0 0
    %359 = vmatprep.subr.bf16.mxu0 0
    %360 = vmatpush2.bf16.msra.mxu0 0
    %361 = vmatprep.subr.bf16.mxu0 0
    %362 = vmatpush2.bf16.msra.mxu0 0
    %363 = vmatprep.subr.bf16.mxu0 0
    %364 = vmatpush2.bf16.msra.mxu0 0
    %365 = vmatprep.subr.bf16.mxu0 0
    %366 = vmatpush2.bf16.msra.mxu0 0
    %367 = vmatprep.subr.bf16.mxu0 0
    %368 = vmatpush2.bf16.msra.mxu0 0
    %369 = vmatprep.subr.bf16.mxu0 0
    %370 = vmatpush2.bf16.msra.mxu0 0
    %371 = vmatprep.mubr.bf16.mxu0 0
    %372 = vmatmul.mubr.bf16.gmra.mxu0 %v337
    %v373 = vpop.f32.mrf.mxu0
    %v374 = vadd.f32 %v78, %v373
    %v375 = vpop.f32.mrf.mxu0
    %v376 = vpop.f32.mrf.mxu0
    %v377 = vpop.f32.mrf.mxu0
    %378 = vdwg.mxu0
    %v379 = vxor.u32 %v374, 2147483648
    %v380 = vmul.f32 %v379, 1.442695
    %v381 = vpow.pop %v380
    %v382 = vadd.f32 %v381, 1.0
    %v383 = vrcp.pop %v382
    %v384 = vmul.f32 1.0, %v383
    %v385 = vtanh.pop %v374
    %v386 = vmul.f32 %v384, %v146
    %388 = vrot.lane.b32.xlu0 %v385, 64
    %v389 = vpop.permute.xlu0 %388
    %v391 = vmul.f32 %v384, %v389
    %393 = vrot.lane.b32.xlu0 %v391, 32
    %v394 = vpop.permute.xlu0 %393
    %v396 = vadd.f32 %v386, %v394
    %v397 = vtanh.pop %v396
    %399 = vrot.lane.b32.xlu0 %v397, 64
    %v400 = vpop.permute.xlu0 %399
    %v402 = vmul.f32 %v384, %v400
    %404 = vrot.lane.b32.xlu0 %v402, 32
    %v405 = vpop.permute.xlu0 %404
    %408 = vrot.lane.b32.xlu0 %v225, 64
    %v409 = vpop.permute.xlu0 %408
    %v411 = vsel %vm82, %v405, %v409
    %v412 = vpack.c.bf16 %v411, %v411
    %v414 = vsel %vm85, %v412, 0
    %416 = vmatprep.subr.bf16.mxu0 0
    %417 = vmatpush1.bf16.msra.mxu0 0
    %418 = vmatprep.subr.bf16.mxu0 0
    %419 = vmatpush1.bf16.msra.mxu0 0
    %420 = vmatprep.subr.bf16.mxu0 0
    %421 = vmatpush1.bf16.msra.mxu0 0
    %422 = vmatprep.subr.bf16.mxu0 0
    %423 = vmatpush1.bf16.msra.mxu0 0
    %424 = vmatprep.subr.bf16.mxu0 0
    %425 = vmatpush1.bf16.msra.mxu0 %v71
    %426 = vmatprep.subr.bf16.mxu0 0
    %427 = vmatpush1.bf16.msra.mxu0 %v70
    %428 = vmatprep.subr.bf16.mxu0 0
    %429 = vmatpush1.bf16.msra.mxu0 %v69
    %430 = vmatprep.subr.bf16.mxu0 0
    %431 = vmatpush1.bf16.msra.mxu0 %v68
    %432 = vmatprep.subr.bf16.mxu0 0
    %433 = vmatpush2.bf16.msra.mxu0 0
    %434 = vmatprep.subr.bf16.mxu0 0
    %435 = vmatpush2.bf16.msra.mxu0 0
    %436 = vmatprep.subr.bf16.mxu0 0
    %437 = vmatpush2.bf16.msra.mxu0 0
    %438 = vmatprep.subr.bf16.mxu0 0
    %439 = vmatpush2.bf16.msra.mxu0 0
    %440 = vmatprep.subr.bf16.mxu0 0
    %441 = vmatpush2.bf16.msra.mxu0 0
    %442 = vmatprep.subr.bf16.mxu0 0
    %443 = vmatpush2.bf16.msra.mxu0 0
    %444 = vmatprep.subr.bf16.mxu0 0
    %445 = vmatpush2.bf16.msra.mxu0 0
    %446 = vmatprep.subr.bf16.mxu0 0
    %447 = vmatpush2.bf16.msra.mxu0 0
    %448 = vmatprep.mubr.bf16.mxu0 0
    %449 = vmatmul.mubr.bf16.gmra.mxu0 %v414
    %v450 = vpop.f32.mrf.mxu0
    %v451 = vadd.f32 %v79, %v450
    %v452 = vpop.f32.mrf.mxu0
    %v453 = vpop.f32.mrf.mxu0
    %v454 = vpop.f32.mrf.mxu0
    %455 = vdwg.mxu0
    %v456 = vxor.u32 %v451, 2147483648
    %v457 = vmul.f32 %v456, 1.442695
    %v458 = vpow.pop %v457
    %v459 = vadd.f32 %v458, 1.0
    %v460 = vrcp.pop %v459
    %v461 = vmul.f32 1.0, %v460
    %v462 = vtanh.pop %v451
    %v463 = vmul.f32 %v461, %v219
    %465 = vrot.lane.b32.xlu0 %v462, 64
    %v466 = vpop.permute.xlu0 %465
    %v468 = vmul.f32 %v461, %v466
    %470 = vrot.lane.b32.xlu0 %v468, 32
    %v471 = vpop.permute.xlu0 %470
    %v473 = vadd.f32 %v463, %v471
    %v474 = vtanh.pop %v473
    %476 = vrot.lane.b32.xlu0 %v474, 64
    %v477 = vpop.permute.xlu0 %476
    %v479 = vmul.f32 %v461, %v477
    %v480 = vpack.c.bf16 %v479, %v479
    %482 = vrot.lane.b32.xlu0 %v480, 32
    %v483 = vpop.permute.xlu0 %482
    %v485 = vsel %vm82, %v483, 0
    %487 = vmatprep.subr.bf16.mxu0 0
    %488 = vmatpush1.bf16.msra.mxu0 0
    %489 = vmatprep.subr.bf16.mxu0 0
    %490 = vmatpush1.bf16.msra.mxu0 0
    %491 = vmatprep.subr.bf16.mxu0 0
    %492 = vmatpush1.bf16.msra.mxu0 0
    %493 = vmatprep.subr.bf16.mxu0 0
    %494 = vmatpush1.bf16.msra.mxu0 0
    %495 = vmatprep.subr.bf16.mxu0 0
    %496 = vmatpush1.bf16.msra.mxu0 0
    %497 = vmatprep.subr.bf16.mxu0 0
    %498 = vmatpush1.bf16.msra.mxu0 0
    %499 = vmatprep.subr.bf16.mxu0 0
    %500 = vmatpush1.bf16.msra.mxu0 %v77
    %501 = vmatprep.subr.bf16.mxu0 0
    %502 = vmatpush1.bf16.msra.mxu0 %v76
    %503 = vmatprep.subr.bf16.mxu0 0
    %504 = vmatpush2.bf16.msra.mxu0 0
    %505 = vmatprep.subr.bf16.mxu0 0
    %506 = vmatpush2.bf16.msra.mxu0 0
    %507 = vmatprep.subr.bf16.mxu0 0
    %508 = vmatpush2.bf16.msra.mxu0 0
    %509 = vmatprep.subr.bf16.mxu0 0
    %510 = vmatpush2.bf16.msra.mxu0 0
    %511 = vmatprep.subr.bf16.mxu0 0
    %512 = vmatpush2.bf16.msra.mxu0 0
    %513 = vmatprep.subr.bf16.mxu0 0
    %514 = vmatpush2.bf16.msra.mxu0 0
    %515 = vmatprep.subr.bf16.mxu0 0
    %516 = vmatpush2.bf16.msra.mxu0 0
    %517 = vmatprep.subr.bf16.mxu0 0
    %518 = vmatpush2.bf16.msra.mxu0 0
    %519 = vmatprep.mubr.bf16.mxu0 0
    %520 = vmatmul.mubr.bf16.gmra.mxu0 %v485
    %v521 = vpop.f32.mrf.mxu0
    %v522 = vadd.f32 %v80, %v521
    %v523 = vpop.f32.mrf.mxu0
    %v524 = vpop.f32.mrf.mxu0
    %v525 = vpop.f32.mrf.mxu0
    %526 = vdwg.mxu0
    %v527 = vmul.f32 %v522, 0.2
    %v528 = vtanh.pop %v527
    %v529 = vmul.f32 %v528, 2.5
    %v530 = vld [vmem:[#allocation2 + $0xa5] sm:$0x1]
    %v531 = vadd.f32 %v529, %v530
    %v532 = vsel %vm278, %v531, -inf
    %533 = vmax.xlane.f32.xlu0 %v532
    %v534 = vpop.xlane.xlu0 %533
    %vm535 = vcmp.eq.f32.partialorder %v531, %v534
    %v536 = vsel %vm535, %v45, 128
    %v537 = vsel %vm278, %v536, 2147483647
    %v538 = vand.u32 %v537, 65535
    %v539 = vshra.s32 %v537, 16
    %v540 = vcvt.s32.f32 %v538
    %v541 = vcvt.s32.f32 %v539
    %542 = vmin.xlane.f32.xlu0 %v541
    %v543 = vpop.xlane.xlu0 %542
    %vm544 = vcmp.eq.f32.partialorder %v541, %v543
    %v545 = vsel %vm544, %v540, inf
    %546 = vmin.xlane.f32.xlu0 %v545
    %v547 = vpop.xlane.xlu0 %546
    %v548 = vcvt.f32.s32 %v547
    %v549 = vcvt.f32.s32 %v543
    %v550 = vshll.u32 %v549, 16
    %v551 = vadd.s32 %v550, %v548
    %s552 = vtos %v551
    %s553 = scalar_lea.smem [#allocation11], 1
    %554 = sst [smem:[%s553]] %s552
    %v555 = vadd.f32 %v529, %v47
    %v556 = vsel %vm278, %v555, -inf
    %557 = vmax.xlane.f32.xlu0 %v556
    %v558 = vpop.xlane.xlu0 %557
    %v559 = vsub.f32 %v555, %v558
    %v560 = vmul.f32 %v559, 1.442695
    %v561 = vpow.pop %v560
    %v562 = vsel %vm278, %v561, 0.0
    %563 = vadd.xlane.f32.xlu0 %v562
    %v564 = vpop.xlane.xlu0 %563
    %v565 = vlog2.pop %v564
    %v566 = vmul.f32 %v565, 0.6931472
    %v567 = vrcp.pop %v564
    %vm568 = vcmp.eq.s32.totalorder %v45, %v551
    %v569 = vsel %vm568, %v559, 0.0
    %v570 = vsel %vm278, %v569, 0.0
    %571 = vadd.xlane.f32.xlu0 %v570
    %v572 = vpop.xlane.xlu0 %571
    %v573 = vadd.f32 %v321, %v572
    %v574 = vsub.f32 %v573, %v566
    %v575 = vadd.f32 %v328, %v566
    %v576 = vmul.f32 %v561, %v559
    %v577 = vsel %vm278, %v576, 0.0
    %578 = vadd.xlane.f32.xlu0 %v577
    %v579 = vpop.xlane.xlu0 %578
    %v580 = vmul.f32 %v579, %v567
    %v581 = vsub.f32 %v575, %v580
    %s582 = scalar_lea.vmem [#allocation6], %s552
    %v583 = vld [vmem:[%s582] sm:$0x1]
    %584 = vrot.lane.b32.xlu0 %v402, 64
    %v585 = vpop.permute.xlu0 %584
    %v587 = vsel %vm82, %v583, %v585
    %v588 = vpack.c.bf16 %v587, %v587
    %v590 = vsel %vm85, %v588, 0
    %592 = vmatprep.subr.bf16.mxu0 0
    %593 = vmatpush1.bf16.msra.mxu0 0
    %594 = vmatprep.subr.bf16.mxu0 0
    %595 = vmatpush1.bf16.msra.mxu0 0
    %596 = vmatprep.subr.bf16.mxu0 0
    %597 = vmatpush1.bf16.msra.mxu0 0
    %598 = vmatprep.subr.bf16.mxu0 0
    %599 = vmatpush1.bf16.msra.mxu0 0
    %600 = vmatprep.subr.bf16.mxu0 0
    %601 = vmatpush1.bf16.msra.mxu0 %v59
    %602 = vmatprep.subr.bf16.mxu0 0
    %603 = vmatpush1.bf16.msra.mxu0 %v58
    %604 = vmatprep.subr.bf16.mxu0 0
    %605 = vmatpush1.bf16.msra.mxu0 %v57
    %606 = vmatprep.subr.bf16.mxu0 0
    %607 = vmatpush1.bf16.msra.mxu0 %v56
    %608 = vmatprep.subr.bf16.mxu0 0
    %609 = vmatpush2.bf16.msra.mxu0 0
    %610 = vmatprep.subr.bf16.mxu0 0
    %611 = vmatpush2.bf16.msra.mxu0 0
    %612 = vmatprep.subr.bf16.mxu0 0
    %613 = vmatpush2.bf16.msra.mxu0 0
    %614 = vmatprep.subr.bf16.mxu0 0
    %615 = vmatpush2.bf16.msra.mxu0 0
    %616 = vmatprep.subr.bf16.mxu0 0
    %617 = vmatpush2.bf16.msra.mxu0 0
    %618 = vmatprep.subr.bf16.mxu0 0
    %619 = vmatpush2.bf16.msra.mxu0 0
    %620 = vmatprep.subr.bf16.mxu0 0
    %621 = vmatpush2.bf16.msra.mxu0 0
    %622 = vmatprep.subr.bf16.mxu0 0
    %623 = vmatpush2.bf16.msra.mxu0 0
    %624 = vmatprep.mubr.bf16.mxu0 0
    %625 = vmatmul.mubr.bf16.gmra.mxu0 %v590
    %v626 = vpop.f32.mrf.mxu0
    %v627 = vadd.f32 %v78, %v626
    %v628 = vpop.f32.mrf.mxu0
    %v629 = vpop.f32.mrf.mxu0
    %v630 = vpop.f32.mrf.mxu0
    %631 = vdwg.mxu0
    %v632 = vxor.u32 %v627, 2147483648
    %v633 = vmul.f32 %v632, 1.442695
    %v634 = vpow.pop %v633
    %v635 = vadd.f32 %v634, 1.0
    %v636 = vrcp.pop %v635
    %v637 = vmul.f32 1.0, %v636
    %v638 = vtanh.pop %v627
    %v639 = vmul.f32 %v637, %v396
    %641 = vrot.lane.b32.xlu0 %v638, 64
    %v642 = vpop.permute.xlu0 %641
    %v644 = vmul.f32 %v637, %v642
    %646 = vrot.lane.b32.xlu0 %v644, 32
    %v647 = vpop.permute.xlu0 %646
    %v649 = vadd.f32 %v639, %v647
    %v650 = vtanh.pop %v649
    %652 = vrot.lane.b32.xlu0 %v650, 64
    %v653 = vpop.permute.xlu0 %652
    %v655 = vmul.f32 %v637, %v653
    %657 = vrot.lane.b32.xlu0 %v655, 32
    %v658 = vpop.permute.xlu0 %657
    %661 = vrot.lane.b32.xlu0 %v479, 64
    %v662 = vpop.permute.xlu0 %661
    %v664 = vsel %vm82, %v658, %v662
    %v665 = vpack.c.bf16 %v664, %v664
    %v667 = vsel %vm85, %v665, 0
    %669 = vmatprep.subr.bf16.mxu0 0
    %670 = vmatpush1.bf16.msra.mxu0 0
    %671 = vmatprep.subr.bf16.mxu0 0
    %672 = vmatpush1.bf16.msra.mxu0 0
    %673 = vmatprep.subr.bf16.mxu0 0
    %674 = vmatpush1.bf16.msra.mxu0 0
    %675 = vmatprep.subr.bf16.mxu0 0
    %676 = vmatpush1.bf16.msra.mxu0 0
    %677 = vmatprep.subr.bf16.mxu0 0
    %678 = vmatpush1.bf16.msra.mxu0 %v71
    %679 = vmatprep.subr.bf16.mxu0 0
    %680 = vmatpush1.bf16.msra.mxu0 %v70
    %681 = vmatprep.subr.bf16.mxu0 0
    %682 = vmatpush1.bf16.msra.mxu0 %v69
    %683 = vmatprep.subr.bf16.mxu0 0
    %684 = vmatpush1.bf16.msra.mxu0 %v68
    %685 = vmatprep.subr.bf16.mxu0 0
    %686 = vmatpush2.bf16.msra.mxu0 0
    %687 = vmatprep.subr.bf16.mxu0 0
    %688 = vmatpush2.bf16.msra.mxu0 0
    %689 = vmatprep.subr.bf16.mxu0 0
    %690 = vmatpush2.bf16.msra.mxu0 0
    %691 = vmatprep.subr.bf16.mxu0 0
    %692 = vmatpush2.bf16.msra.mxu0 0
    %693 = vmatprep.subr.bf16.mxu0 0
    %694 = vmatpush2.bf16.msra.mxu0 0
    %695 = vmatprep.subr.bf16.mxu0 0
    %696 = vmatpush2.bf16.msra.mxu0 0
    %697 = vmatprep.subr.bf16.mxu0 0
    %698 = vmatpush2.bf16.msra.mxu0 0
    %699 = vmatprep.subr.bf16.mxu0 0
    %700 = vmatpush2.bf16.msra.mxu0 0
    %701 = vmatprep.mubr.bf16.mxu0 0
    %702 = vmatmul.mubr.bf16.gmra.mxu0 %v667
    %v703 = vpop.f32.mrf.mxu0
    %v704 = vadd.f32 %v79, %v703
    %v705 = vpop.f32.mrf.mxu0
    %v706 = vpop.f32.mrf.mxu0
    %v707 = vpop.f32.mrf.mxu0
    %708 = vdwg.mxu0
    %v709 = vxor.u32 %v704, 2147483648
    %v710 = vmul.f32 %v709, 1.442695
    %v711 = vpow.pop %v710
    %v712 = vadd.f32 %v711, 1.0
    %v713 = vrcp.pop %v712
    %v714 = vmul.f32 1.0, %v713
    %v715 = vtanh.pop %v704
    %v716 = vmul.f32 %v714, %v473
    %718 = vrot.lane.b32.xlu0 %v715, 64
    %v719 = vpop.permute.xlu0 %718
    %v721 = vmul.f32 %v714, %v719
    %723 = vrot.lane.b32.xlu0 %v721, 32
    %v724 = vpop.permute.xlu0 %723
    %v726 = vadd.f32 %v716, %v724
    %v727 = vtanh.pop %v726
    %729 = vrot.lane.b32.xlu0 %v727, 64
    %v730 = vpop.permute.xlu0 %729
    %v732 = vmul.f32 %v714, %v730
    %v733 = vpack.c.bf16 %v732, %v732
    %735 = vrot.lane.b32.xlu0 %v733, 32
    %v736 = vpop.permute.xlu0 %735
    %v738 = vsel %vm82, %v736, 0
    %740 = vmatprep.subr.bf16.mxu0 0
    %741 = vmatpush1.bf16.msra.mxu0 0
    %742 = vmatprep.subr.bf16.mxu0 0
    %743 = vmatpush1.bf16.msra.mxu0 0
    %744 = vmatprep.subr.bf16.mxu0 0
    %745 = vmatpush1.bf16.msra.mxu0 0
    %746 = vmatprep.subr.bf16.mxu0 0
    %747 = vmatpush1.bf16.msra.mxu0 0
    %748 = vmatprep.subr.bf16.mxu0 0
    %749 = vmatpush1.bf16.msra.mxu0 0
    %750 = vmatprep.subr.bf16.mxu0 0
    %751 = vmatpush1.bf16.msra.mxu0 0
    %752 = vmatprep.subr.bf16.mxu0 0
    %753 = vmatpush1.bf16.msra.mxu0 %v77
    %754 = vmatprep.subr.bf16.mxu0 0
    %755 = vmatpush1.bf16.msra.mxu0 %v76
    %756 = vmatprep.subr.bf16.mxu0 0
    %757 = vmatpush2.bf16.msra.mxu0 0
    %758 = vmatprep.subr.bf16.mxu0 0
    %759 = vmatpush2.bf16.msra.mxu0 0
    %760 = vmatprep.subr.bf16.mxu0 0
    %761 = vmatpush2.bf16.msra.mxu0 0
    %762 = vmatprep.subr.bf16.mxu0 0
    %763 = vmatpush2.bf16.msra.mxu0 0
    %764 = vmatprep.subr.bf16.mxu0 0
    %765 = vmatpush2.bf16.msra.mxu0 0
    %766 = vmatprep.subr.bf16.mxu0 0
    %767 = vmatpush2.bf16.msra.mxu0 0
    %768 = vmatprep.subr.bf16.mxu0 0
    %769 = vmatpush2.bf16.msra.mxu0 0
    %770 = vmatprep.subr.bf16.mxu0 0
    %771 = vmatpush2.bf16.msra.mxu0 0
    %772 = vmatprep.mubr.bf16.mxu0 0
    %773 = vmatmul.mubr.bf16.gmra.mxu0 %v738
    %v774 = vpop.f32.mrf.mxu0
    %v775 = vadd.f32 %v80, %v774
    %v776 = vpop.f32.mrf.mxu0
    %v777 = vpop.f32.mrf.mxu0
    %v778 = vpop.f32.mrf.mxu0
    %779 = vdwg.mxu0
    %v780 = vmul.f32 %v775, 0.2
    %v781 = vtanh.pop %v780
    %v782 = vmul.f32 %v781, 2.5
    %v783 = vld [vmem:[#allocation2 + $0xa6] sm:$0x1]
    %v784 = vadd.f32 %v782, %v783
    %v785 = vsel %vm278, %v784, -inf
    %786 = vmax.xlane.f32.xlu0 %v785
    %v787 = vpop.xlane.xlu0 %786
    %vm788 = vcmp.eq.f32.partialorder %v784, %v787
    %v789 = vsel %vm788, %v45, 128
    %v790 = vsel %vm278, %v789, 2147483647
    %v791 = vand.u32 %v790, 65535
    %v792 = vshra.s32 %v790, 16
    %v793 = vcvt.s32.f32 %v791
    %v794 = vcvt.s32.f32 %v792
    %795 = vmin.xlane.f32.xlu0 %v794
    %v796 = vpop.xlane.xlu0 %795
    %vm797 = vcmp.eq.f32.partialorder %v794, %v796
    %v798 = vsel %vm797, %v793, inf
    %799 = vmin.xlane.f32.xlu0 %v798
    %v800 = vpop.xlane.xlu0 %799
    %v801 = vcvt.f32.s32 %v800
    %v802 = vcvt.f32.s32 %v796
    %v803 = vshll.u32 %v802, 16
    %v804 = vadd.s32 %v803, %v801
    %s805 = vtos %v804
    %s806 = scalar_lea.smem [#allocation11], 2
    %807 = sst [smem:[%s806]] %s805
    %v808 = vadd.f32 %v782, %v47
    %v809 = vsel %vm278, %v808, -inf
    %810 = vmax.xlane.f32.xlu0 %v809
    %v811 = vpop.xlane.xlu0 %810
    %v812 = vsub.f32 %v808, %v811
    %v813 = vmul.f32 %v812, 1.442695
    %v814 = vpow.pop %v813
    %v815 = vsel %vm278, %v814, 0.0
    %816 = vadd.xlane.f32.xlu0 %v815
    %v817 = vpop.xlane.xlu0 %816
    %v818 = vlog2.pop %v817
    %v819 = vmul.f32 %v818, 0.6931472
    %v820 = vrcp.pop %v817
    %vm821 = vcmp.eq.s32.totalorder %v45, %v804
    %v822 = vsel %vm821, %v812, 0.0
    %v823 = vsel %vm278, %v822, 0.0
    %824 = vadd.xlane.f32.xlu0 %v823
    %v825 = vpop.xlane.xlu0 %824
    %v826 = vadd.f32 %v574, %v825
    %v827 = vsub.f32 %v826, %v819
    %v828 = vadd.f32 %v581, %v819
    %v829 = vmul.f32 %v814, %v812
    %v830 = vsel %vm278, %v829, 0.0
    %831 = vadd.xlane.f32.xlu0 %v830
    %v832 = vpop.xlane.xlu0 %831
    %v833 = vmul.f32 %v832, %v820
    %v834 = vsub.f32 %v828, %v833
    %s835 = scalar_lea.vmem [#allocation6], %s805
    %v836 = vld [vmem:[%s835] sm:$0x1]
    %837 = vrot.lane.b32.xlu0 %v655, 64
    %v838 = vpop.permute.xlu0 %837
    %v840 = vsel %vm82, %v836, %v838
    %v841 = vpack.c.bf16 %v840, %v840
    %v843 = vsel %vm85, %v841, 0
    %845 = vmatprep.subr.bf16.mxu0 0
    %846 = vmatpush1.bf16.msra.mxu0 0
    %847 = vmatprep.subr.bf16.mxu0 0
    %848 = vmatpush1.bf16.msra.mxu0 0
    %849 = vmatprep.subr.bf16.mxu0 0
    %850 = vmatpush1.bf16.msra.mxu0 0
    %851 = vmatprep.subr.bf16.mxu0 0
    %852 = vmatpush1.bf16.msra.mxu0 0
    %853 = vmatprep.subr.bf16.mxu0 0
    %854 = vmatpush1.bf16.msra.mxu0 %v59
    %855 = vmatprep.subr.bf16.mxu0 0
    %856 = vmatpush1.bf16.msra.mxu0 %v58
    %857 = vmatprep.subr.bf16.mxu0 0
    %858 = vmatpush1.bf16.msra.mxu0 %v57
    %859 = vmatprep.subr.bf16.mxu0 0
    %860 = vmatpush1.bf16.msra.mxu0 %v56
    %861 = vmatprep.subr.bf16.mxu0 0
    %862 = vmatpush2.bf16.msra.mxu0 0
    %863 = vmatprep.subr.bf16.mxu0 0
    %864 = vmatpush2.bf16.msra.mxu0 0
    %865 = vmatprep.subr.bf16.mxu0 0
    %866 = vmatpush2.bf16.msra.mxu0 0
    %867 = vmatprep.subr.bf16.mxu0 0
    %868 = vmatpush2.bf16.msra.mxu0 0
    %869 = vmatprep.subr.bf16.mxu0 0
    %870 = vmatpush2.bf16.msra.mxu0 0
    %871 = vmatprep.subr.bf16.mxu0 0
    %872 = vmatpush2.bf16.msra.mxu0 0
    %873 = vmatprep.subr.bf16.mxu0 0
    %874 = vmatpush2.bf16.msra.mxu0 0
    %875 = vmatprep.subr.bf16.mxu0 0
    %876 = vmatpush2.bf16.msra.mxu0 0
    %877 = vmatprep.mubr.bf16.mxu0 0
    %878 = vmatmul.mubr.bf16.gmra.mxu0 %v843
    %v879 = vpop.f32.mrf.mxu0
    %v880 = vadd.f32 %v78, %v879
    %v881 = vpop.f32.mrf.mxu0
    %v882 = vpop.f32.mrf.mxu0
    %v883 = vpop.f32.mrf.mxu0
    %884 = vdwg.mxu0
    %v885 = vxor.u32 %v880, 2147483648
    %v886 = vmul.f32 %v885, 1.442695
    %v887 = vpow.pop %v886
    %v888 = vadd.f32 %v887, 1.0
    %v889 = vrcp.pop %v888
    %v890 = vmul.f32 1.0, %v889
    %v891 = vtanh.pop %v880
    %v892 = vmul.f32 %v890, %v649
    %894 = vrot.lane.b32.xlu0 %v891, 64
    %v895 = vpop.permute.xlu0 %894
    %v897 = vmul.f32 %v890, %v895
    %899 = vrot.lane.b32.xlu0 %v897, 32
    %v900 = vpop.permute.xlu0 %899
    %v902 = vadd.f32 %v892, %v900
    %v903 = vtanh.pop %v902
    %905 = vrot.lane.b32.xlu0 %v903, 64
    %v906 = vpop.permute.xlu0 %905
    %v908 = vmul.f32 %v890, %v906
    %910 = vrot.lane.b32.xlu0 %v908, 32
    %v911 = vpop.permute.xlu0 %910
    %914 = vrot.lane.b32.xlu0 %v732, 64
    %v915 = vpop.permute.xlu0 %914
    %v917 = vsel %vm82, %v911, %v915
    %v918 = vpack.c.bf16 %v917, %v917
    %v920 = vsel %vm85, %v918, 0
    %922 = vmatprep.subr.bf16.mxu0 0
    %923 = vmatpush1.bf16.msra.mxu0 0
    %924 = vmatprep.subr.bf16.mxu0 0
    %925 = vmatpush1.bf16.msra.mxu0 0
    %926 = vmatprep.subr.bf16.mxu0 0
    %927 = vmatpush1.bf16.msra.mxu0 0
    %928 = vmatprep.subr.bf16.mxu0 0
    %929 = vmatpush1.bf16.msra.mxu0 0
    %930 = vmatprep.subr.bf16.mxu0 0
    %931 = vmatpush1.bf16.msra.mxu0 %v71
    %932 = vmatprep.subr.bf16.mxu0 0
    %933 = vmatpush1.bf16.msra.mxu0 %v70
    %934 = vmatprep.subr.bf16.mxu0 0
    %935 = vmatpush1.bf16.msra.mxu0 %v69
    %936 = vmatprep.subr.bf16.mxu0 0
    %937 = vmatpush1.bf16.msra.mxu0 %v68
    %938 = vmatprep.subr.bf16.mxu0 0
    %939 = vmatpush2.bf16.msra.mxu0 0
    %940 = vmatprep.subr.bf16.mxu0 0
    %941 = vmatpush2.bf16.msra.mxu0 0
    %942 = vmatprep.subr.bf16.mxu0 0
    %943 = vmatpush2.bf16.msra.mxu0 0
    %944 = vmatprep.subr.bf16.mxu0 0
    %945 = vmatpush2.bf16.msra.mxu0 0
    %946 = vmatprep.subr.bf16.mxu0 0
    %947 = vmatpush2.bf16.msra.mxu0 0
    %948 = vmatprep.subr.bf16.mxu0 0
    %949 = vmatpush2.bf16.msra.mxu0 0
    %950 = vmatprep.subr.bf16.mxu0 0
    %951 = vmatpush2.bf16.msra.mxu0 0
    %952 = vmatprep.subr.bf16.mxu0 0
    %953 = vmatpush2.bf16.msra.mxu0 0
    %954 = vmatprep.mubr.bf16.mxu0 0
    %955 = vmatmul.mubr.bf16.gmra.mxu0 %v920
    %v956 = vpop.f32.mrf.mxu0
    %v957 = vadd.f32 %v79, %v956
    %v958 = vpop.f32.mrf.mxu0
    %v959 = vpop.f32.mrf.mxu0
    %v960 = vpop.f32.mrf.mxu0
    %961 = vdwg.mxu0
    %v962 = vxor.u32 %v957, 2147483648
    %v963 = vmul.f32 %v962, 1.442695
    %v964 = vpow.pop %v963
    %v965 = vadd.f32 %v964, 1.0
    %v966 = vrcp.pop %v965
    %v967 = vmul.f32 1.0, %v966
    %v968 = vtanh.pop %v957
    %v969 = vmul.f32 %v967, %v726
    %971 = vrot.lane.b32.xlu0 %v968, 64
    %v972 = vpop.permute.xlu0 %971
    %v974 = vmul.f32 %v967, %v972
    %976 = vrot.lane.b32.xlu0 %v974, 32
    %v977 = vpop.permute.xlu0 %976
    %v979 = vadd.f32 %v969, %v977
    %v980 = vtanh.pop %v979
    %982 = vrot.lane.b32.xlu0 %v980, 64
    %v983 = vpop.permute.xlu0 %982
    %v985 = vmul.f32 %v967, %v983
    %v986 = vpack.c.bf16 %v985, %v985
    %988 = vrot.lane.b32.xlu0 %v986, 32
    %v989 = vpop.permute.xlu0 %988
    %v991 = vsel %vm82, %v989, 0
    %993 = vmatprep.subr.bf16.mxu0 0
    %994 = vmatpush1.bf16.msra.mxu0 0
    %995 = vmatprep.subr.bf16.mxu0 0
    %996 = vmatpush1.bf16.msra.mxu0 0
    %997 = vmatprep.subr.bf16.mxu0 0
    %998 = vmatpush1.bf16.msra.mxu0 0
    %999 = vmatprep.subr.bf16.mxu0 0
    %1000 = vmatpush1.bf16.msra.mxu0 0
    %1001 = vmatprep.subr.bf16.mxu0 0
    %1002 = vmatpush1.bf16.msra.mxu0 0
    %1003 = vmatprep.subr.bf16.mxu0 0
    %1004 = vmatpush1.bf16.msra.mxu0 0
    %1005 = vmatprep.subr.bf16.mxu0 0
    %1006 = vmatpush1.bf16.msra.mxu0 %v77
    %1007 = vmatprep.subr.bf16.mxu0 0
    %1008 = vmatpush1.bf16.msra.mxu0 %v76
    %1009 = vmatprep.subr.bf16.mxu0 0
    %1010 = vmatpush2.bf16.msra.mxu0 0
    %1011 = vmatprep.subr.bf16.mxu0 0
    %1012 = vmatpush2.bf16.msra.mxu0 0
    %1013 = vmatprep.subr.bf16.mxu0 0
    %1014 = vmatpush2.bf16.msra.mxu0 0
    %1015 = vmatprep.subr.bf16.mxu0 0
    %1016 = vmatpush2.bf16.msra.mxu0 0
    %1017 = vmatprep.subr.bf16.mxu0 0
    %1018 = vmatpush2.bf16.msra.mxu0 0
    %1019 = vmatprep.subr.bf16.mxu0 0
    %1020 = vmatpush2.bf16.msra.mxu0 0
    %1021 = vmatprep.subr.bf16.mxu0 0
    %1022 = vmatpush2.bf16.msra.mxu0 0
    %1023 = vmatprep.subr.bf16.mxu0 0
    %1024 = vmatpush2.bf16.msra.mxu0 0
    %1025 = vmatprep.mubr.bf16.mxu0 0
    %1026 = vmatmul.mubr.bf16.gmra.mxu0 %v991
    %v1027 = vpop.f32.mrf.mxu0
    %v1028 = vadd.f32 %v80, %v1027
    %v1029 = vpop.f32.mrf.mxu0
    %v1030 = vpop.f32.mrf.mxu0
    %v1031 = vpop.f32.mrf.mxu0
    %1032 = vdwg.mxu0
    %v1033 = vmul.f32 %v1028, 0.2
    %v1034 = vtanh.pop %v1033
    %v1035 = vmul.f32 %v1034, 2.5
    %v1036 = vld [vmem:[#allocation2 + $0xa7] sm:$0x1]
    %v1037 = vadd.f32 %v1035, %v1036
    %v1038 = vsel %vm278, %v1037, -inf
    %1039 = vmax.xlane.f32.xlu0 %v1038
    %v1040 = vpop.xlane.xlu0 %1039
    %vm1041 = vcmp.eq.f32.partialorder %v1037, %v1040
    %v1042 = vsel %vm1041, %v45, 128
    %v1043 = vsel %vm278, %v1042, 2147483647
    %v1044 = vand.u32 %v1043, 65535
    %v1045 = vshra.s32 %v1043, 16
    %v1046 = vcvt.s32.f32 %v1044
    %v1047 = vcvt.s32.f32 %v1045
    %1048 = vmin.xlane.f32.xlu0 %v1047
    %v1049 = vpop.xlane.xlu0 %1048
    %vm1050 = vcmp.eq.f32.partialorder %v1047, %v1049
    %v1051 = vsel %vm1050, %v1046, inf
    %1052 = vmin.xlane.f32.xlu0 %v1051
    %v1053 = vpop.xlane.xlu0 %1052
    %v1054 = vcvt.f32.s32 %v1053
    %v1055 = vcvt.f32.s32 %v1049
    %v1056 = vshll.u32 %v1055, 16
    %v1057 = vadd.s32 %v1056, %v1054
    %s1058 = vtos %v1057
    %s1059 = scalar_lea.smem [#allocation11], 3
    %1060 = sst [smem:[%s1059]] %s1058
    %v1061 = vadd.f32 %v1035, %v47
    %v1062 = vsel %vm278, %v1061, -inf
    %1063 = vmax.xlane.f32.xlu0 %v1062
    %v1064 = vpop.xlane.xlu0 %1063
    %v1065 = vsub.f32 %v1061, %v1064
    %v1066 = vmul.f32 %v1065, 1.442695
    %v1067 = vpow.pop %v1066
    %v1068 = vsel %vm278, %v1067, 0.0
    %1069 = vadd.xlane.f32.xlu0 %v1068
    %v1070 = vpop.xlane.xlu0 %1069
    %v1071 = vlog2.pop %v1070
    %v1072 = vmul.f32 %v1071, 0.6931472
    %v1073 = vrcp.pop %v1070
    %vm1074 = vcmp.eq.s32.totalorder %v45, %v1057
    %v1075 = vsel %vm1074, %v1065, 0.0
    %v1076 = vsel %vm278, %v1075, 0.0
    %1077 = vadd.xlane.f32.xlu0 %v1076
    %v1078 = vpop.xlane.xlu0 %1077
    %v1079 = vadd.f32 %v827, %v1078
    %v1080 = vsub.f32 %v1079, %v1072
    %v1081 = vadd.f32 %v834, %v1072
    %v1082 = vmul.f32 %v1067, %v1065
    %v1083 = vsel %vm278, %v1082, 0.0
    %1084 = vadd.xlane.f32.xlu0 %v1083
    %v1085 = vpop.xlane.xlu0 %1084
    %v1086 = vmul.f32 %v1085, %v1073
    %v1087 = vsub.f32 %v1081, %v1086
    %s1088 = scalar_lea.vmem [#allocation6], %s1058
    %v1089 = vld [vmem:[%s1088] sm:$0x1]
    %1090 = vrot.lane.b32.xlu0 %v908, 64
    %v1091 = vpop.permute.xlu0 %1090
    %v1093 = vsel %vm82, %v1089, %v1091
    %v1094 = vpack.c.bf16 %v1093, %v1093
    %v1096 = vsel %vm85, %v1094, 0
    %1098 = vmatprep.subr.bf16.mxu0 0
    %1099 = vmatpush1.bf16.msra.mxu0 0
    %1100 = vmatprep.subr.bf16.mxu0 0
    %1101 = vmatpush1.bf16.msra.mxu0 0
    %1102 = vmatprep.subr.bf16.mxu0 0
    %1103 = vmatpush1.bf16.msra.mxu0 0
    %1104 = vmatprep.subr.bf16.mxu0 0
    %1105 = vmatpush1.bf16.msra.mxu0 0
    %1106 = vmatprep.subr.bf16.mxu0 0
    %1107 = vmatpush1.bf16.msra.mxu0 %v59
    %1108 = vmatprep.subr.bf16.mxu0 0
    %1109 = vmatpush1.bf16.msra.mxu0 %v58
    %1110 = vmatprep.subr.bf16.mxu0 0
    %1111 = vmatpush1.bf16.msra.mxu0 %v57
    %1112 = vmatprep.subr.bf16.mxu0 0
    %1113 = vmatpush1.bf16.msra.mxu0 %v56
    %1114 = vmatprep.subr.bf16.mxu0 0
    %1115 = vmatpush2.bf16.msra.mxu0 0
    %1116 = vmatprep.subr.bf16.mxu0 0
    %1117 = vmatpush2.bf16.msra.mxu0 0
    %1118 = vmatprep.subr.bf16.mxu0 0
    %1119 = vmatpush2.bf16.msra.mxu0 0
    %1120 = vmatprep.subr.bf16.mxu0 0
    %1121 = vmatpush2.bf16.msra.mxu0 0
    %1122 = vmatprep.subr.bf16.mxu0 0
    %1123 = vmatpush2.bf16.msra.mxu0 0
    %1124 = vmatprep.subr.bf16.mxu0 0
    %1125 = vmatpush2.bf16.msra.mxu0 0
    %1126 = vmatprep.subr.bf16.mxu0 0
    %1127 = vmatpush2.bf16.msra.mxu0 0
    %1128 = vmatprep.subr.bf16.mxu0 0
    %1129 = vmatpush2.bf16.msra.mxu0 0
    %1130 = vmatprep.mubr.bf16.mxu0 0
    %1131 = vmatmul.mubr.bf16.gmra.mxu0 %v1096
    %v1132 = vpop.f32.mrf.mxu0
    %v1133 = vadd.f32 %v78, %v1132
    %v1134 = vpop.f32.mrf.mxu0
    %v1135 = vpop.f32.mrf.mxu0
    %v1136 = vpop.f32.mrf.mxu0
    %1137 = vdwg.mxu0
    %v1138 = vxor.u32 %v1133, 2147483648
    %v1139 = vmul.f32 %v1138, 1.442695
    %v1140 = vpow.pop %v1139
    %v1141 = vadd.f32 %v1140, 1.0
    %v1142 = vrcp.pop %v1141
    %v1143 = vmul.f32 1.0, %v1142
    %v1144 = vtanh.pop %v1133
    %v1145 = vmul.f32 %v1143, %v902
    %1147 = vrot.lane.b32.xlu0 %v1144, 64
    %v1148 = vpop.permute.xlu0 %1147
    %v1150 = vmul.f32 %v1143, %v1148
    %1152 = vrot.lane.b32.xlu0 %v1150, 32
    %v1153 = vpop.permute.xlu0 %1152
    %v1155 = vadd.f32 %v1145, %v1153
    %v1156 = vtanh.pop %v1155
    %1158 = vrot.lane.b32.xlu0 %v1156, 64
    %v1159 = vpop.permute.xlu0 %1158
    %v1161 = vmul.f32 %v1143, %v1159
    %1163 = vrot.lane.b32.xlu0 %v1161, 32
    %v1164 = vpop.permute.xlu0 %1163
    %1167 = vrot.lane.b32.xlu0 %v985, 64
    %v1168 = vpop.permute.xlu0 %1167
    %v1170 = vsel %vm82, %v1164, %v1168
    %v1171 = vpack.c.bf16 %v1170, %v1170
    %v1173 = vsel %vm85, %v1171, 0
    %1175 = vmatprep.subr.bf16.mxu0 0
    %1176 = vmatpush1.bf16.msra.mxu0 0
    %1177 = vmatprep.subr.bf16.mxu0 0
    %1178 = vmatpush1.bf16.msra.mxu0 0
    %1179 = vmatprep.subr.bf16.mxu0 0
    %1180 = vmatpush1.bf16.msra.mxu0 0
    %1181 = vmatprep.subr.bf16.mxu0 0
    %1182 = vmatpush1.bf16.msra.mxu0 0
    %1183 = vmatprep.subr.bf16.mxu0 0
    %1184 = vmatpush1.bf16.msra.mxu0 %v71
    %1185 = vmatprep.subr.bf16.mxu0 0
    %1186 = vmatpush1.bf16.msra.mxu0 %v70
    %1187 = vmatprep.subr.bf16.mxu0 0
    %1188 = vmatpush1.bf16.msra.mxu0 %v69
    %1189 = vmatprep.subr.bf16.mxu0 0
    %1190 = vmatpush1.bf16.msra.mxu0 %v68
    %1191 = vmatprep.subr.bf16.mxu0 0
    %1192 = vmatpush2.bf16.msra.mxu0 0
    %1193 = vmatprep.subr.bf16.mxu0 0
    %1194 = vmatpush2.bf16.msra.mxu0 0
    %1195 = vmatprep.subr.bf16.mxu0 0
    %1196 = vmatpush2.bf16.msra.mxu0 0
    %1197 = vmatprep.subr.bf16.mxu0 0
    %1198 = vmatpush2.bf16.msra.mxu0 0
    %1199 = vmatprep.subr.bf16.mxu0 0
    %1200 = vmatpush2.bf16.msra.mxu0 0
    %1201 = vmatprep.subr.bf16.mxu0 0
    %1202 = vmatpush2.bf16.msra.mxu0 0
    %1203 = vmatprep.subr.bf16.mxu0 0
    %1204 = vmatpush2.bf16.msra.mxu0 0
    %1205 = vmatprep.subr.bf16.mxu0 0
    %1206 = vmatpush2.bf16.msra.mxu0 0
    %1207 = vmatprep.mubr.bf16.mxu0 0
    %1208 = vmatmul.mubr.bf16.gmra.mxu0 %v1173
    %v1209 = vpop.f32.mrf.mxu0
    %v1210 = vadd.f32 %v79, %v1209
    %v1211 = vpop.f32.mrf.mxu0
    %v1212 = vpop.f32.mrf.mxu0
    %v1213 = vpop.f32.mrf.mxu0
    %1214 = vdwg.mxu0
    %v1215 = vxor.u32 %v1210, 2147483648
    %v1216 = vmul.f32 %v1215, 1.442695
    %v1217 = vpow.pop %v1216
    %v1218 = vadd.f32 %v1217, 1.0
    %v1219 = vrcp.pop %v1218
    %v1220 = vmul.f32 1.0, %v1219
    %v1221 = vtanh.pop %v1210
    %v1222 = vmul.f32 %v1220, %v979
    %1224 = vrot.lane.b32.xlu0 %v1221, 64
    %v1225 = vpop.permute.xlu0 %1224
    %v1227 = vmul.f32 %v1220, %v1225
    %1229 = vrot.lane.b32.xlu0 %v1227, 32
    %v1230 = vpop.permute.xlu0 %1229
    %v1232 = vadd.f32 %v1222, %v1230
    %v1233 = vtanh.pop %v1232
    %1235 = vrot.lane.b32.xlu0 %v1233, 64
    %v1236 = vpop.permute.xlu0 %1235
    %v1238 = vmul.f32 %v1220, %v1236
    %v1239 = vpack.c.bf16 %v1238, %v1238
    %1241 = vrot.lane.b32.xlu0 %v1239, 32
    %v1242 = vpop.permute.xlu0 %1241
    %v1244 = vsel %vm82, %v1242, 0
    %1246 = vmatprep.subr.bf16.mxu0 0
    %1247 = vmatpush1.bf16.msra.mxu0 0
    %1248 = vmatprep.subr.bf16.mxu0 0
    %1249 = vmatpush1.bf16.msra.mxu0 0
    %1250 = vmatprep.subr.bf16.mxu0 0
    %1251 = vmatpush1.bf16.msra.mxu0 0
    %1252 = vmatprep.subr.bf16.mxu0 0
    %1253 = vmatpush1.bf16.msra.mxu0 0
    %1254 = vmatprep.subr.bf16.mxu0 0
    %1255 = vmatpush1.bf16.msra.mxu0 0
    %1256 = vmatprep.subr.bf16.mxu0 0
    %1257 = vmatpush1.bf16.msra.mxu0 0
    %1258 = vmatprep.subr.bf16.mxu0 0
    %1259 = vmatpush1.bf16.msra.mxu0 %v77
    %1260 = vmatprep.subr.bf16.mxu0 0
    %1261 = vmatpush1.bf16.msra.mxu0 %v76
    %1262 = vmatprep.subr.bf16.mxu0 0
    %1263 = vmatpush2.bf16.msra.mxu0 0
    %1264 = vmatprep.subr.bf16.mxu0 0
    %1265 = vmatpush2.bf16.msra.mxu0 0
    %1266 = vmatprep.subr.bf16.mxu0 0
    %1267 = vmatpush2.bf16.msra.mxu0 0
    %1268 = vmatprep.subr.bf16.mxu0 0
    %1269 = vmatpush2.bf16.msra.mxu0 0
    %1270 = vmatprep.subr.bf16.mxu0 0
    %1271 = vmatpush2.bf16.msra.mxu0 0
    %1272 = vmatprep.subr.bf16.mxu0 0
    %1273 = vmatpush2.bf16.msra.mxu0 0
    %1274 = vmatprep.subr.bf16.mxu0 0
    %1275 = vmatpush2.bf16.msra.mxu0 0
    %1276 = vmatprep.subr.bf16.mxu0 0
    %1277 = vmatpush2.bf16.msra.mxu0 0
    %1278 = vmatprep.mubr.bf16.mxu0 0
    %1279 = vmatmul.mubr.bf16.gmra.mxu0 %v1244
    %v1280 = vpop.f32.mrf.mxu0
    %v1281 = vadd.f32 %v80, %v1280
    %v1282 = vpop.f32.mrf.mxu0
    %v1283 = vpop.f32.mrf.mxu0
    %v1284 = vpop.f32.mrf.mxu0
    %1285 = vdwg.mxu0
    %v1286 = vmul.f32 %v1281, 0.2
    %v1287 = vtanh.pop %v1286
    %v1288 = vmul.f32 %v1287, 2.5
    %v1289 = vld [vmem:[#allocation2 + $0xa8] sm:$0x1]
    %v1290 = vadd.f32 %v1288, %v1289
    %v1291 = vsel %vm278, %v1290, -inf
    %1292 = vmax.xlane.f32.xlu0 %v1291
    %v1293 = vpop.xlane.xlu0 %1292
    %vm1294 = vcmp.eq.f32.partialorder %v1290, %v1293
    %v1295 = vsel %vm1294, %v45, 128
    %v1296 = vsel %vm278, %v1295, 2147483647
    %v1297 = vand.u32 %v1296, 65535
    %v1298 = vshra.s32 %v1296, 16
    %v1299 = vcvt.s32.f32 %v1297
    %v1300 = vcvt.s32.f32 %v1298
    %1301 = vmin.xlane.f32.xlu0 %v1300
    %v1302 = vpop.xlane.xlu0 %1301
    %vm1303 = vcmp.eq.f32.partialorder %v1300, %v1302
    %v1304 = vsel %vm1303, %v1299, inf
    %1305 = vmin.xlane.f32.xlu0 %v1304
    %v1306 = vpop.xlane.xlu0 %1305
    %v1307 = vcvt.f32.s32 %v1306
    %v1308 = vcvt.f32.s32 %v1302
    %v1309 = vshll.u32 %v1308, 16
    %v1310 = vadd.s32 %v1309, %v1307
    %s1311 = vtos %v1310
    %s1312 = scalar_lea.smem [#allocation11], 4
    %1313 = sst [smem:[%s1312]] %s1311
    %v1314 = vadd.f32 %v1288, %v47
    %v1315 = vsel %vm278, %v1314, -inf
    %1316 = vmax.xlane.f32.xlu0 %v1315
    %v1317 = vpop.xlane.xlu0 %1316
    %v1318 = vsub.f32 %v1314, %v1317
    %v1319 = vmul.f32 %v1318, 1.442695
    %v1320 = vpow.pop %v1319
    %v1321 = vsel %vm278, %v1320, 0.0
    %1322 = vadd.xlane.f32.xlu0 %v1321
    %v1323 = vpop.xlane.xlu0 %1322
    %v1324 = vlog2.pop %v1323
    %v1325 = vmul.f32 %v1324, 0.6931472
    %v1326 = vrcp.pop %v1323
    %vm1327 = vcmp.eq.s32.totalorder %v45, %v1310
    %v1328 = vsel %vm1327, %v1318, 0.0
    %v1329 = vsel %vm278, %v1328, 0.0
    %1330 = vadd.xlane.f32.xlu0 %v1329
    %v1331 = vpop.xlane.xlu0 %1330
    %v1332 = vadd.f32 %v1080, %v1331
    %v1333 = vsub.f32 %v1332, %v1325
    %v1334 = vadd.f32 %v1087, %v1325
    %v1335 = vmul.f32 %v1320, %v1318
    %v1336 = vsel %vm278, %v1335, 0.0
    %1337 = vadd.xlane.f32.xlu0 %v1336
    %v1338 = vpop.xlane.xlu0 %1337
    %v1339 = vmul.f32 %v1338, %v1326
    %v1340 = vsub.f32 %v1334, %v1339
    %s1341 = scalar_lea.vmem [#allocation6], %s1311
    %v1342 = vld [vmem:[%s1341] sm:$0x1]
    %1343 = vrot.lane.b32.xlu0 %v1161, 64
    %v1344 = vpop.permute.xlu0 %1343
    %v1346 = vsel %vm82, %v1342, %v1344
    %v1347 = vpack.c.bf16 %v1346, %v1346
    %v1349 = vsel %vm85, %v1347, 0
    %1351 = vmatprep.subr.bf16.mxu0 0
    %1352 = vmatpush1.bf16.msra.mxu0 0
    %1353 = vmatprep.subr.bf16.mxu0 0
    %1354 = vmatpush1.bf16.msra.mxu0 0
    %1355 = vmatprep.subr.bf16.mxu0 0
    %1356 = vmatpush1.bf16.msra.mxu0 0
    %1357 = vmatprep.subr.bf16.mxu0 0
    %1358 = vmatpush1.bf16.msra.mxu0 0
    %1359 = vmatprep.subr.bf16.mxu0 0
    %1360 = vmatpush1.bf16.msra.mxu0 %v59
    %1361 = vmatprep.subr.bf16.mxu0 0
    %1362 = vmatpush1.bf16.msra.mxu0 %v58
    %1363 = vmatprep.subr.bf16.mxu0 0
    %1364 = vmatpush1.bf16.msra.mxu0 %v57
    %1365 = vmatprep.subr.bf16.mxu0 0
    %1366 = vmatpush1.bf16.msra.mxu0 %v56
    %1367 = vmatprep.subr.bf16.mxu0 0
    %1368 = vmatpush2.bf16.msra.mxu0 0
    %1369 = vmatprep.subr.bf16.mxu0 0
    %1370 = vmatpush2.bf16.msra.mxu0 0
    %1371 = vmatprep.subr.bf16.mxu0 0
    %1372 = vmatpush2.bf16.msra.mxu0 0
    %1373 = vmatprep.subr.bf16.mxu0 0
    %1374 = vmatpush2.bf16.msra.mxu0 0
    %1375 = vmatprep.subr.bf16.mxu0 0
    %1376 = vmatpush2.bf16.msra.mxu0 0
    %1377 = vmatprep.subr.bf16.mxu0 0
    %1378 = vmatpush2.bf16.msra.mxu0 0
    %1379 = vmatprep.subr.bf16.mxu0 0
    %1380 = vmatpush2.bf16.msra.mxu0 0
    %1381 = vmatprep.subr.bf16.mxu0 0
    %1382 = vmatpush2.bf16.msra.mxu0 0
    %1383 = vmatprep.mubr.bf16.mxu0 0
    %1384 = vmatmul.mubr.bf16.gmra.mxu0 %v1349
    %v1385 = vpop.f32.mrf.mxu0
    %v1386 = vadd.f32 %v78, %v1385
    %v1387 = vpop.f32.mrf.mxu0
    %v1388 = vpop.f32.mrf.mxu0
    %v1389 = vpop.f32.mrf.mxu0
    %1390 = vdwg.mxu0
    %v1391 = vxor.u32 %v1386, 2147483648
    %v1392 = vmul.f32 %v1391, 1.442695
    %v1393 = vpow.pop %v1392
    %v1394 = vadd.f32 %v1393, 1.0
    %v1395 = vrcp.pop %v1394
    %v1396 = vmul.f32 1.0, %v1395
    %v1397 = vtanh.pop %v1386
    %v1398 = vmul.f32 %v1396, %v1155
    %1400 = vrot.lane.b32.xlu0 %v1397, 64
    %v1401 = vpop.permute.xlu0 %1400
    %v1403 = vmul.f32 %v1396, %v1401
    %1405 = vrot.lane.b32.xlu0 %v1403, 32
    %v1406 = vpop.permute.xlu0 %1405
    %v1408 = vadd.f32 %v1398, %v1406
    %v1409 = vtanh.pop %v1408
    %1411 = vrot.lane.b32.xlu0 %v1409, 64
    %v1412 = vpop.permute.xlu0 %1411
    %v1414 = vmul.f32 %v1396, %v1412
    %1416 = vrot.lane.b32.xlu0 %v1414, 32
    %v1417 = vpop.permute.xlu0 %1416
    %1420 = vrot.lane.b32.xlu0 %v1238, 64
    %v1421 = vpop.permute.xlu0 %1420
    %v1423 = vsel %vm82, %v1417, %v1421
    %v1424 = vpack.c.bf16 %v1423, %v1423
    %v1426 = vsel %vm85, %v1424, 0
    %1428 = vmatprep.subr.bf16.mxu0 0
    %1429 = vmatpush1.bf16.msra.mxu0 0
    %1430 = vmatprep.subr.bf16.mxu0 0
    %1431 = vmatpush1.bf16.msra.mxu0 0
    %1432 = vmatprep.subr.bf16.mxu0 0
    %1433 = vmatpush1.bf16.msra.mxu0 0
    %1434 = vmatprep.subr.bf16.mxu0 0
    %1435 = vmatpush1.bf16.msra.mxu0 0
    %1436 = vmatprep.subr.bf16.mxu0 0
    %1437 = vmatpush1.bf16.msra.mxu0 %v71
    %1438 = vmatprep.subr.bf16.mxu0 0
    %1439 = vmatpush1.bf16.msra.mxu0 %v70
    %1440 = vmatprep.subr.bf16.mxu0 0
    %1441 = vmatpush1.bf16.msra.mxu0 %v69
    %1442 = vmatprep.subr.bf16.mxu0 0
    %1443 = vmatpush1.bf16.msra.mxu0 %v68
    %1444 = vmatprep.subr.bf16.mxu0 0
    %1445 = vmatpush2.bf16.msra.mxu0 0
    %1446 = vmatprep.subr.bf16.mxu0 0
    %1447 = vmatpush2.bf16.msra.mxu0 0
    %1448 = vmatprep.subr.bf16.mxu0 0
    %1449 = vmatpush2.bf16.msra.mxu0 0
    %1450 = vmatprep.subr.bf16.mxu0 0
    %1451 = vmatpush2.bf16.msra.mxu0 0
    %1452 = vmatprep.subr.bf16.mxu0 0
    %1453 = vmatpush2.bf16.msra.mxu0 0
    %1454 = vmatprep.subr.bf16.mxu0 0
    %1455 = vmatpush2.bf16.msra.mxu0 0
    %1456 = vmatprep.subr.bf16.mxu0 0
    %1457 = vmatpush2.bf16.msra.mxu0 0
    %1458 = vmatprep.subr.bf16.mxu0 0
    %1459 = vmatpush2.bf16.msra.mxu0 0
    %1460 = vmatprep.mubr.bf16.mxu0 0
    %1461 = vmatmul.mubr.bf16.gmra.mxu0 %v1426
    %v1462 = vpop.f32.mrf.mxu0
    %v1463 = vadd.f32 %v79, %v1462
    %v1464 = vpop.f32.mrf.mxu0
    %v1465 = vpop.f32.mrf.mxu0
    %v1466 = vpop.f32.mrf.mxu0
    %1467 = vdwg.mxu0
    %v1468 = vxor.u32 %v1463, 2147483648
    %v1469 = vmul.f32 %v1468, 1.442695
    %v1470 = vpow.pop %v1469
    %v1471 = vadd.f32 %v1470, 1.0
    %v1472 = vrcp.pop %v1471
    %v1473 = vmul.f32 1.0, %v1472
    %v1474 = vtanh.pop %v1463
    %v1475 = vmul.f32 %v1473, %v1232
    %1477 = vrot.lane.b32.xlu0 %v1474, 64
    %v1478 = vpop.permute.xlu0 %1477
    %v1480 = vmul.f32 %v1473, %v1478
    %1482 = vrot.lane.b32.xlu0 %v1480, 32
    %v1483 = vpop.permute.xlu0 %1482
    %v1485 = vadd.f32 %v1475, %v1483
    %v1486 = vtanh.pop %v1485
    %1488 = vrot.lane.b32.xlu0 %v1486, 64
    %v1489 = vpop.permute.xlu0 %1488
    %v1491 = vmul.f32 %v1473, %v1489
    %v1492 = vpack.c.bf16 %v1491, %v1491
    %1494 = vrot.lane.b32.xlu0 %v1492, 32
    %v1495 = vpop.permute.xlu0 %1494
    %v1497 = vsel %vm82, %v1495, 0
    %1499 = vmatprep.subr.bf16.mxu0 0
    %1500 = vmatpush1.bf16.msra.mxu0 0
    %1501 = vmatprep.subr.bf16.mxu0 0
    %1502 = vmatpush1.bf16.msra.mxu0 0
    %1503 = vmatprep.subr.bf16.mxu0 0
    %1504 = vmatpush1.bf16.msra.mxu0 0
    %1505 = vmatprep.subr.bf16.mxu0 0
    %1506 = vmatpush1.bf16.msra.mxu0 0
    %1507 = vmatprep.subr.bf16.mxu0 0
    %1508 = vmatpush1.bf16.msra.mxu0 0
    %1509 = vmatprep.subr.bf16.mxu0 0
    %1510 = vmatpush1.bf16.msra.mxu0 0
    %1511 = vmatprep.subr.bf16.mxu0 0
    %1512 = vmatpush1.bf16.msra.mxu0 %v77
    %1513 = vmatprep.subr.bf16.mxu0 0
    %1514 = vmatpush1.bf16.msra.mxu0 %v76
    %1515 = vmatprep.subr.bf16.mxu0 0
    %1516 = vmatpush2.bf16.msra.mxu0 0
    %1517 = vmatprep.subr.bf16.mxu0 0
    %1518 = vmatpush2.bf16.msra.mxu0 0
    %1519 = vmatprep.subr.bf16.mxu0 0
    %1520 = vmatpush2.bf16.msra.mxu0 0
    %1521 = vmatprep.subr.bf16.mxu0 0
    %1522 = vmatpush2.bf16.msra.mxu0 0
    %1523 = vmatprep.subr.bf16.mxu0 0
    %1524 = vmatpush2.bf16.msra.mxu0 0
    %1525 = vmatprep.subr.bf16.mxu0 0
    %1526 = vmatpush2.bf16.msra.mxu0 0
    %1527 = vmatprep.subr.bf16.mxu0 0
    %1528 = vmatpush2.bf16.msra.mxu0 0
    %1529 = vmatprep.subr.bf16.mxu0 0
    %1530 = vmatpush2.bf16.msra.mxu0 0
    %1531 = vmatprep.mubr.bf16.mxu0 0
    %1532 = vmatmul.mubr.bf16.gmra.mxu0 %v1497
    %v1533 = vpop.f32.mrf.mxu0
    %v1534 = vadd.f32 %v80, %v1533
    %v1535 = vpop.f32.mrf.mxu0
    %v1536 = vpop.f32.mrf.mxu0
    %v1537 = vpop.f32.mrf.mxu0
    %1538 = vdwg.mxu0
    %v1539 = vmul.f32 %v1534, 0.2
    %v1540 = vtanh.pop %v1539
    %v1541 = vmul.f32 %v1540, 2.5
    %v1542 = vld [vmem:[#allocation2 + $0xa9] sm:$0x1]
    %v1543 = vadd.f32 %v1541, %v1542
    %v1544 = vsel %vm278, %v1543, -inf
    %1545 = vmax.xlane.f32.xlu0 %v1544
    %v1546 = vpop.xlane.xlu0 %1545
    %vm1547 = vcmp.eq.f32.partialorder %v1543, %v1546
    %v1548 = vsel %vm1547, %v45, 128
    %v1549 = vsel %vm278, %v1548, 2147483647
    %v1550 = vand.u32 %v1549, 65535
    %v1551 = vshra.s32 %v1549, 16
    %v1552 = vcvt.s32.f32 %v1550
    %v1553 = vcvt.s32.f32 %v1551
    %1554 = vmin.xlane.f32.xlu0 %v1553
    %v1555 = vpop.xlane.xlu0 %1554
    %vm1556 = vcmp.eq.f32.partialorder %v1553, %v1555
    %v1557 = vsel %vm1556, %v1552, inf
    %1558 = vmin.xlane.f32.xlu0 %v1557
    %v1559 = vpop.xlane.xlu0 %1558
    %v1560 = vcvt.f32.s32 %v1559
    %v1561 = vcvt.f32.s32 %v1555
    %v1562 = vshll.u32 %v1561, 16
    %v1563 = vadd.s32 %v1562, %v1560
    %s1564 = vtos %v1563
    %s1565 = scalar_lea.smem [#allocation11], 5
    %1566 = sst [smem:[%s1565]] %s1564
    %v1567 = vadd.f32 %v1541, %v47
    %v1568 = vsel %vm278, %v1567, -inf
    %1569 = vmax.xlane.f32.xlu0 %v1568
    %v1570 = vpop.xlane.xlu0 %1569
    %v1571 = vsub.f32 %v1567, %v1570
    %v1572 = vmul.f32 %v1571, 1.442695
    %v1573 = vpow.pop %v1572
    %v1574 = vsel %vm278, %v1573, 0.0
    %1575 = vadd.xlane.f32.xlu0 %v1574
    %v1576 = vpop.xlane.xlu0 %1575
    %v1577 = vlog2.pop %v1576
    %v1578 = vmul.f32 %v1577, 0.6931472
    %v1579 = vrcp.pop %v1576
    %vm1580 = vcmp.eq.s32.totalorder %v45, %v1563
    %v1581 = vsel %vm1580, %v1571, 0.0
    %v1582 = vsel %vm278, %v1581, 0.0
    %1583 = vadd.xlane.f32.xlu0 %v1582
    %v1584 = vpop.xlane.xlu0 %1583
    %v1585 = vadd.f32 %v1333, %v1584
    %v1586 = vsub.f32 %v1585, %v1578
    %v1587 = vadd.f32 %v1340, %v1578
    %v1588 = vmul.f32 %v1573, %v1571
    %v1589 = vsel %vm278, %v1588, 0.0
    %1590 = vadd.xlane.f32.xlu0 %v1589
    %v1591 = vpop.xlane.xlu0 %1590
    %v1592 = vmul.f32 %v1591, %v1579
    %v1593 = vsub.f32 %v1587, %v1592
    %vm1594 = vcmask 0
    %1595 = vst.msk [vmem:[#allocation8] sm:$0x1] %vm1594, %v1586
    %1596 = vst.msk [vmem:[#allocation9] sm:$0x1] %vm1594, %v1593
    // Predicated region
    $region18: #{tpu_custom_call.1} parent=1 // pred_check
      _
    $region19: #{tpu_custom_call.1} parent=1 // pred_check_branch
      %1598 = sbr.rel (0) target = $region21
    $region20: #{tpu_custom_call.1} parent=1 // pred_region
      %s1600 = ssub.s32 16, 16
      %1601 = vsyncadd [#allocation4], %s1600
      %s1603 = sshll.u32 [#allocation8], 4
      %s1604 = int_to_ptr.vmem [resolvable:$true] %s1603
      %1606 = dma.vmem_to_hbm [thread:$0]  %s1604, 16, %s2, [#allocation4]
    $region21: #{tpu_custom_call.1} parent=1 // pred_fallthru
      _
    // Predicated region
    $region22: #{tpu_custom_call.1} parent=1 // pred_check
      _
    $region23: #{tpu_custom_call.1} parent=1 // pred_check_branch
      %1608 = sbr.rel (0) target = $region25
    $region24: #{tpu_custom_call.1} parent=1 // pred_region
      %s1610 = ssub.s32 16, 16
      %1611 = vsyncadd [#allocation10], %s1610
      %s1613 = sshll.u32 [#allocation9], 4
      %s1614 = int_to_ptr.vmem [resolvable:$true] %s1613
      %1616 = dma.vmem_to_hbm [thread:$0]  %s1614, 16, %s3, [#allocation10]
    $region25: #{tpu_custom_call.1} parent=1 // pred_fallthru
      _
    // Predicated region
    $region26: #{tpu_custom_call.1} parent=1 // pred_check
      _
    $region27: #{tpu_custom_call.1} parent=1 // pred_check_branch
      %1618 = sbr.rel (0) target = $region29
    $region28: #{tpu_custom_call.1} parent=1 // pred_region
      %s1620 = ssub.s32 16, 16
      %1621 = vsyncadd [#allocation5], %s1620
      %1624 = dma.smem_to_hbm [#allocation11], 16, %s4, [#allocation5]
    $region29: #{tpu_custom_call.1} parent=1 // pred_fallthru
      _
    // Predicated region
    $region30: #{tpu_custom_call.1} parent=1 // pred_check
      _
    $region31: #{tpu_custom_call.1} parent=1 // pred_check_branch
      %1626 = sbr.rel (0) target = $region33
    $region32: #{tpu_custom_call.1} parent=1 // pred_region
      %1627 = dma.done [#allocation4], 16
    $region33: #{tpu_custom_call.1} parent=1 // pred_fallthru
      _
    // Predicated region
    $region34: #{tpu_custom_call.1} parent=1 // pred_check
      _
    $region35: #{tpu_custom_call.1} parent=1 // pred_check_branch
      %1629 = sbr.rel (0) target = $region37
    $region36: #{tpu_custom_call.1} parent=1 // pred_region
      %1630 = dma.done [#allocation10], 16
    $region37: #{tpu_custom_call.1} parent=1 // pred_fallthru
      _
    // Predicated region
    $region38: #{tpu_custom_call.1} parent=1 // pred_check
      _
    $region39: #{tpu_custom_call.1} parent=1 // pred_check_branch
      %1632 = sbr.rel (0) target = $region41
    $region40: #{tpu_custom_call.1} parent=1 // pred_region
      %1633 = dma.done [#allocation5], 16
    $region41: #{tpu_custom_call.1} parent=1 // pred_fallthru
      _
    %1634 = sfence
    %1635 = vsyncpa [#allocation3], 1
    %1636 = vsyncpa [#allocation7], 1
    %1637 = vsyncpa [#allocation4], 1
    %1638 = vsyncpa [#allocation10], 1
    %1639 = vsyncpa [#allocation5], 1

</llo_original>
